<compile_context>
chip_gen: v7x
topology: tpu7x:2x2x1
jax: 0.10.0
libtpu: 0.0.40
codegen_flags: <defaults>
</compile_context>

<pallas_src>
import functools
import math

import jax
import jax.numpy as jnp
from jax import lax
from jax.experimental import pallas as pl
from jax.experimental.pallas import tpu as pltpu

# MXU operand dtype (accumulation is always f32 via preferred_element_type).
MXU_DTYPE = jnp.bfloat16

_NEG_BIG = -1e30  # finite "-inf" for masking padded columns


def equi_attention_kernel(
    # scalar (SMEM) inputs
    comb_ref, bcomb_ref,
    # i-side row blocks (block index depends only on i -> fetched once per i)
    q_ref, ai_ref, h_ref, x_ref,
    # j-side column blocks
    k_ref, v1_ref, x1_ref, ajt_ref,
    # outputs (row blocks, written at the last j step)
    h_out_ref, x_out_ref,
    # scratch (persistent across the j axis)
    m_sc, acc_hv, acc_xr,
    *, n_valid, need_mask,
):
    j = pl.program_id(1)
    nj = pl.num_programs(1)
    TI, H = q_ref.shape
    TJ = k_ref.shape[0]
    C = x_ref.shape[-1]
    scale = 1.0 / (H ** 0.5)

    @pl.when(j == 0)
    def _init():
        m_sc[...] = jnp.full_like(m_sc, -jnp.inf)
        acc_hv[...] = jnp.zeros_like(acc_hv)
        acc_xr[...] = jnp.zeros_like(acc_xr)

    # ---- attention logits: q_i . k_j / sqrt(H)  (bf16 operands, f32 acc) ----
    logits = lax.dot_general(
        q_ref[...], k_ref[...],
        (((1,), (1,)), ((), ())),
        preferred_element_type=jnp.float32) * scale            # (TI, TJ)

    if need_mask:  # static python bool: only emitted when N was padded
        col = j * TJ + lax.broadcasted_iota(jnp.int32, (TI, TJ), 1)
        logits = jnp.where(col < n_valid, logits, _NEG_BIG)

    # ---- online softmax update ----
    m_prev = m_sc[...]
    m_new = jnp.maximum(m_prev, jnp.max(logits, axis=-1, keepdims=True))
    alpha = jnp.exp(m_prev - m_new)                            # (TI, 1)
    p = jnp.exp(logits - m_new)                                # (TI, TJ) f32, unnormalized
    m_sc[...] = m_new

    # p @ [v | 1] -> (acc_h | l): softmax denominator folded into the matmul.
    acc_hv[...] = alpha * acc_hv[...] + jnp.dot(
        p.astype(MXU_DTYPE), v1_ref[...], preferred_element_type=jnp.float32)

    # ---- coordinate path: c[i,j] = sum_h comb[h]*relu(ai_i[h] - a_j[h]) + bcomb
    # No (TI, TJ, H) intermediate: a static per-h loop keeps everything in
    # (TI, TJ) vreg tiles (sub + relu + scalar-mul + add per element, no
    # cross-lane reduce).  For very large H this could be chunked with
    # lax.fori_loop(..., unroll=True) instead of full Python unrolling.
    ai = ai_ref[...]                       # (TI, H)  f32, already includes be1
    ajt = ajt_ref[0]                       # (H, TJ)  f32, pre-transposed in wrapper
    c = jnp.zeros((TI, TJ), jnp.float32) + bcomb_ref[0]
    for hh in range(H):
        diff = ai[:, hh:hh + 1] - ajt[hh:hh + 1, :]            # (TI, TJ)
        c = c + comb_ref[hh] * jnp.maximum(diff, 0.0)

    # w @ [x_j | 1] -> (acc_x | acc_row): row-sum folded into the matmul.
    w = (p * c).astype(MXU_DTYPE)
    acc_xr[...] = alpha * acc_xr[...] + jnp.dot(
        w, x1_ref[...], preferred_element_type=jnp.float32)

    # ---- finalize on the last j block ----
    @pl.when(j == nj - 1)
    def _finalize():
        acc = acc_hv[...]
        inv_l = 1.0 / acc[:, H:H + 1]                          # exact division
        h_out_ref[...] = (h_ref[...] + acc[:, :H] * inv_l).astype(h_out_ref.dtype)
        axr = acc_xr[...]
        x_i = x_ref[...]
        # delta_x_i = (x_i * sum_j attn*c - sum_j attn*c*x_j)
        x_out_ref[...] = (
            x_i + (x_i * axr[:, C:C + 1] - axr[:, :C]) * inv_l
        ).astype(x_out_ref.dtype)


def _round_up(n, m):
    return -(-n // m) * m


def _largest_aligned_divisor(n, cap):
    """Largest multiple of 8 that divides n (n is a multiple of 8) and is <= cap."""
    best = 8
    t = 16
    while t <= min(n, cap):
        if n % t == 0:
            best = t
        t += 8
    return best


def _default_tile_cap():
    # v6e (128 MiB VMEM, 2x256^2 MXU) prefers 256-wide tiles; elsewhere 128.
    try:
        kind = jax.devices()[0].device_kind.lower()
        if "v6" in kind:
            return 256
    except Exception:
        pass
    return 128


def equi_attention_block(params, h, x, batch=None, *, tile_i=None, tile_j=None):
    """Forward pass of EquiAttentionBlock.  Returns (h_out, x_out)."""
    del batch  # unused by the reference forward (kept for signature parity)
    h = jnp.asarray(h, jnp.float32)
    x = jnp.asarray(x, jnp.float32)
    N, H = h.shape
    C = x.shape[-1]

    # ---- tile selection (auto tiles divide round_up(N, 8); explicit tiles
    # must be multiples of 8 or a clear error is raised) ----
    cap = _default_tile_cap()
    n8 = _round_up(N, 8)
    if tile_j is None:
        tile_j = _largest_aligned_divisor(n8, cap)
    if tile_i is None:
        # Keep >= 2 row blocks when possible so the "parallel" i axis can be
        # sharded across the two v7x TensorCores.
        cap_i = min(cap, n8 // 2) if n8 >= 16 else cap
        tile_i = _largest_aligned_divisor(n8, cap_i)
    for name, t in (("tile_i", tile_i), ("tile_j", tile_j)):
        if t < 8 or t % 8 != 0:
            raise ValueError(f"{name}={t} must be a positive multiple of 8")

    n_pad = _round_up(N, math.lcm(tile_i, tile_j))
    if n_pad != N:
        pad = n_pad - N
        h_p = jnp.pad(h, ((0, pad), (0, 0)))
        x_p = jnp.pad(x, ((0, pad), (0, 0)))
    else:
        h_p, x_p = h, x

    # ---- hoisted projections (one XLA matmul each, done once) ----
    q = (h_p @ params["q_w"].T + params["q_b"]).astype(MXU_DTYPE)       # (Np, H)
    k = (h_p @ params["k_w"].T + params["k_b"]).astype(MXU_DTYPE)       # (Np, H)
    v = h_p @ params["v_w"].T + params["v_b"]                           # (Np, H)
    ones = jnp.ones((n_pad, 1), jnp.float32)
    v1 = jnp.concatenate([v, ones], axis=1).astype(MXU_DTYPE)           # (Np, H+1)
    x1 = jnp.concatenate([x_p, ones], axis=1).astype(MXU_DTYPE)         # (Np, C+1)

    # edge_mlp first layer: a = x @ We1 (be1 folded into the i-side only).
    a = x_p @ params["edge1_w"].T                                       # (Np, H)
    ai = (a + params["edge1_b"]).astype(jnp.float32)                    # (Np, H)
    nbj = n_pad // tile_j
    # a^T, pre-sliced into lane-dense per-j-block slabs: (nbj, H, tile_j).
    ajt = jnp.transpose(a, (1, 0)).reshape(H, nbj, tile_j)
    ajt = jnp.transpose(ajt, (1, 0, 2)).astype(jnp.float32)

    # Fold edge_mlp[2] (linear) + coord_mlp (linear) into one length-H vector.
    comb = (params["coord_w"] @ params["edge2_w"]).reshape(H).astype(jnp.float32)
    bcomb = (jnp.sum(params["edge2_b"] * params["coord_w"][0])
             + params["coord_b"][0]).reshape(1).astype(jnp.float32)

    grid = (n_pad // tile_i, nbj)
    smem_spec = pl.BlockSpec(memory_space=pltpu.MemorySpace.SMEM)
    in_specs = [
        smem_spec,                                             # comb  (H,)
        smem_spec,                                             # bcomb (1,)
        pl.BlockSpec((tile_i, H), lambda i, j: (i, 0)),        # q
        pl.BlockSpec((tile_i, H), lambda i, j: (i, 0)),        # a_i + be1
        pl.BlockSpec((tile_i, H), lambda i, j: (i, 0)),        # h (residual)
        pl.BlockSpec((tile_i, C), lambda i, j: (i, 0)),        # x (residual)
        pl.BlockSpec((tile_j, H), lambda i, j: (j, 0)),        # k
        pl.BlockSpec((tile_j, H + 1), lambda i, j: (j, 0)),    # [v | 1]
        pl.BlockSpec((tile_j, C + 1), lambda i, j: (j, 0)),    # [x | 1]
        pl.BlockSpec((1, H, tile_j), lambda i, j: (j, 0, 0)),  # a^T slab
    ]
    out_specs = (
        pl.BlockSpec((tile_i, H), lambda i, j: (i, 0)),        # h_out
        pl.BlockSpec((tile_i, C), lambda i, j: (i, 0)),        # x_out
    )
    scratch_shapes = [
        pltpu.VMEM((tile_i, 1), jnp.float32),                  # running max m
        pltpu.VMEM((tile_i, H + 1), jnp.float32),              # [acc_h | l]
        pltpu.VMEM((tile_i, C + 1), jnp.float32),              # [acc_x | acc_row]
    ]
    out_shapes = (
        jax.ShapeDtypeStruct((n_pad, H), jnp.float32),
        jax.ShapeDtypeStruct((n_pad, C), jnp.float32),
    )

    kernel = functools.partial(
        equi_attention_kernel, n_valid=N, need_mask=(n_pad != N))

    h_out, x_out = pl.pallas_call(
        kernel,
        out_shape=out_shapes,
        grid_spec=pltpu.PrefetchScalarGridSpec(
            num_scalar_prefetch=0,
            grid=grid,
            in_specs=in_specs,
            out_specs=out_specs,
            scratch_shapes=scratch_shapes,
        ),
        compiler_params=pltpu.CompilerParams(
            dimension_semantics=("parallel", "arbitrary"),
            vmem_limit_bytes=48 * 1024 * 1024,
        ),
    )(comb, bcomb, q, ai, h_p, x_p, k, v1, x1, ajt)

    if n_pad != N:
        h_out = h_out[:N]
        x_out = x_out[:N]
    return h_out, x_out


def init_params(key, hidden_dim):
    """Deterministic PyTorch-style (uniform +/- 1/sqrt(fan_in)) init."""
    def linear_init(k, out_f, in_f):
        kw, kb = jax.random.split(k)
        bound = 1.0 / (in_f ** 0.5)
        w = jax.random.uniform(kw, (out_f, in_f), jnp.float32, -bound, bound)
        b = jax.random.uniform(kb, (out_f,), jnp.float32, -bound, bound)
        return w, b

    ks = jax.random.split(key, 6)
    qw, qb = linear_init(ks[0], hidden_dim, hidden_dim)
    kw, kb = linear_init(ks[1], hidden_dim, hidden_dim)
    vw, vb = linear_init(ks[2], hidden_dim, hidden_dim)
    e1w, e1b = linear_init(ks[3], hidden_dim, 2)
    e2w, e2b = linear_init(ks[4], hidden_dim, hidden_dim)
    cw, cb = linear_init(ks[5], 1, hidden_dim)
    return dict(q_w=qw, q_b=qb, k_w=kw, k_b=kb, v_w=vw, v_b=vb,
                edge1_w=e1w, edge1_b=e1b, edge2_w=e2w, edge2_b=e2b,
                coord_w=cw, coord_b=cb)


def reference(params, h, x):
    """Pure-JAX transcription of the PyTorch forward (for validation)."""
    def linear(z, w, b):           # PyTorch layout: w (out, in), b (out,)
        return z @ w.T + b

    rel_x = x[:, None, :] - x[None, :, :]
    e = jax.nn.relu(linear(rel_x, params["edge1_w"], params["edge1_b"]))
    edge_feat = linear(e, params["edge2_w"], params["edge2_b"])
    q = linear(h, params["q_w"], params["q_b"])[:, None, :]
    k = linear(h, params["k_w"], params["k_b"])[None, :, :]
    attn = (q * k).sum(-1) / (h.shape[-1] ** 0.5)
    attn = jax.nn.softmax(attn, axis=-1)
    v = linear(h, params["v_w"], params["v_b"])
    agg_h = attn @ v
    delta_x = linear(edge_feat, params["coord_w"], params["coord_b"]) * rel_x
    delta_x = jnp.sum(attn[..., None] * delta_x, axis=1)
    return h + agg_h, x + delta_x


if __name__ == "__main__":
    HID = 32
    key = jax.random.PRNGKey(0)
    k_h1, k_x1, k_p, k_h2, k_x2, k_h3, k_x3 = jax.random.split(key, 7)
    params = init_params(k_p, HID)

    # Tolerance: bf16 MXU operands (f32 accumulation) vs. the f32 reference.
    ATOL = RTOL = 2e-2

    # ---- case 1: small module-consistent shapes (N=8 nodes, hidden=32) ----
    N1 = 8
    h1 = jax.random.normal(k_h1, (N1, HID), jnp.float32)
    x1 = jax.random.normal(k_x1, (N1, 2), jnp.float32)
    batch = jnp.zeros((N1,), jnp.int32)                 # unused by the forward
    h1_o, x1_o = equi_attention_block(params, h1, x1, batch)
    jax.block_until_ready((h1_o, x1_o))
    h1_r, x1_r = reference(params, h1, x1)
    assert h1_o.shape == (N1, HID) and x1_o.shape == (N1, 2)
    assert jnp.allclose(h1_o, h1_r, atol=ATOL, rtol=RTOL)
    assert jnp.allclose(x1_o, x1_r, atol=ATOL, rtol=RTOL)

    # ---- case 2: multi-tile flash path (grid 4x4 with explicit 8x8 tiles) ----
    N2 = 32
    h2 = jax.random.normal(k_h2, (N2, HID), jnp.float32)
    x2 = jax.random.normal(k_x2, (N2, 2), jnp.float32)
    h2_o, x2_o = equi_attention_block(params, h2, x2, None, tile_i=8, tile_j=8)
    jax.block_until_ready((h2_o, x2_o))
    h2_r, x2_r = reference(params, h2, x2)
    assert jnp.allclose(h2_o, h2_r, atol=ATOL, rtol=RTOL)
    assert jnp.allclose(x2_o, x2_r, atol=ATOL, rtol=RTOL)

    # ---- case 3: N not a multiple of 8 -> padded + masked path, auto tiles ----
    N3 = 13
    h3 = jax.random.normal(k_h3, (N3, HID), jnp.float32)
    x3 = jax.random.normal(k_x3, (N3, 2), jnp.float32)
    h3_o, x3_o = equi_attention_block(params, h3, x3, None)
    jax.block_until_ready((h3_o, x3_o))
    h3_r, x3_r = reference(params, h3, x3)
    assert h3_o.shape == (N3, HID) and x3_o.shape == (N3, 2)
    assert jnp.allclose(h3_o, h3_r, atol=ATOL, rtol=RTOL)
    assert jnp.allclose(x3_o, x3_r, atol=ATOL, rtol=RTOL)

    print("KERNEL_OK")
</pallas_src>

<mosaic_0001>
module attributes {stable_mosaic.version = 11 : i64} {
  func.func @equi_attention_kernel(%arg0: i32, %arg1: i32, %arg2: memref<32xf32, #tpu.memory_space<smem>>, %arg3: memref<1xf32, #tpu.memory_space<smem>>, %arg4: memref<8x32xbf16, #tpu.memory_space<vmem>>, %arg5: memref<8x32xf32, #tpu.memory_space<vmem>>, %arg6: memref<8x32xf32, #tpu.memory_space<vmem>>, %arg7: memref<8x2xf32, #tpu.memory_space<vmem>>, %arg8: memref<8x32xbf16, #tpu.memory_space<vmem>>, %arg9: memref<8x33xbf16, #tpu.memory_space<vmem>>, %arg10: memref<8x3xbf16, #tpu.memory_space<vmem>>, %arg11: memref<1x32x8xf32, #tpu.memory_space<vmem>>, %arg12: memref<8x32xf32, #tpu.memory_space<vmem>>, %arg13: memref<8x2xf32, #tpu.memory_space<vmem>>, %arg14: memref<8x1xf32, #tpu.memory_space<vmem>>, %arg15: memref<8x33xf32, #tpu.memory_space<vmem>>, %arg16: memref<8x3xf32, #tpu.memory_space<vmem>>) attributes {dimension_semantics = [#tpu.dimension_semantics<parallel>, #tpu.dimension_semantics<arbitrary>], iteration_bounds = array<i64: 1, 1>, scalar_prefetch = 0 : i64, scratch_operands = 3 : i64, tpu.core_type = #tpu.core_type<tc>, window_params = [{transform_indices = @transform_0, window_bounds = array<i64: 32>}, {transform_indices = @transform_1, window_bounds = array<i64: 1>}, {transform_indices = @transform_2, window_bounds = array<i64: 8, 32>}, {transform_indices = @transform_3, window_bounds = array<i64: 8, 32>}, {transform_indices = @transform_4, window_bounds = array<i64: 8, 32>}, {transform_indices = @transform_5, window_bounds = array<i64: 8, 2>}, {transform_indices = @transform_6, window_bounds = array<i64: 8, 32>}, {transform_indices = @transform_7, window_bounds = array<i64: 8, 33>}, {transform_indices = @transform_8, window_bounds = array<i64: 8, 3>}, {transform_indices = @transform_9, window_bounds = array<i64: 1, 32, 8>}, {transform_indices = @transform_10, window_bounds = array<i64: 8, 32>}, {transform_indices = @transform_11, window_bounds = array<i64: 8, 2>}]} {
    %c0_i32 = arith.constant 0 : i32
    %0 = arith.cmpi eq, %arg1, %c0_i32 : i32
    %1 = arith.extui %0 : i1 to i32
    %c0_i32_0 = arith.constant 0 : i32
    %2 = arith.cmpi ne, %1, %c0_i32_0 : i32
    scf.if %2 {
      %cst_66 = arith.constant 0xFF800000 : f32
      %397 = vector.broadcast %cst_66 : f32 to vector<8x1xf32>
      %c0_67 = arith.constant 0 : index
      %c0_68 = arith.constant 0 : index
      %398 = vector.load %arg14[%c0_67, %c0_68] : memref<8x1xf32, #tpu.memory_space<vmem>>, vector<8x1xf32>
      tpu.vector_store %arg14[%c0_67, %c0_68], %397 {strides = array<i32>} : memref<8x1xf32, #tpu.memory_space<vmem>>, vector<8x1xf32>,
      %cst_69 = arith.constant 0.000000e+00 : f32
      %399 = vector.broadcast %cst_69 : f32 to vector<8x33xf32>
      %c0_70 = arith.constant 0 : index
      %c0_71 = arith.constant 0 : index
      %400 = vector.load %arg15[%c0_70, %c0_71] : memref<8x33xf32, #tpu.memory_space<vmem>>, vector<8x33xf32>
      tpu.vector_store %arg15[%c0_70, %c0_71], %399 {strides = array<i32>} : memref<8x33xf32, #tpu.memory_space<vmem>>, vector<8x33xf32>,
      %cst_72 = arith.constant 0.000000e+00 : f32
      %401 = vector.broadcast %cst_72 : f32 to vector<8x3xf32>
      %c0_73 = arith.constant 0 : index
      %c0_74 = arith.constant 0 : index
      %402 = vector.load %arg16[%c0_73, %c0_74] : memref<8x3xf32, #tpu.memory_space<vmem>>, vector<8x3xf32>
      tpu.vector_store %arg16[%c0_73, %c0_74], %401 {strides = array<i32>} : memref<8x3xf32, #tpu.memory_space<vmem>>, vector<8x3xf32>,
    } else {
    }
    %c0 = arith.constant 0 : index
    %c0_1 = arith.constant 0 : index
    %3 = vector.load %arg4[%c0, %c0_1] : memref<8x32xbf16, #tpu.memory_space<vmem>>, vector<8x32xbf16>
    %c0_2 = arith.constant 0 : index
    %c0_3 = arith.constant 0 : index
    %4 = vector.load %arg8[%c0_2, %c0_3] : memref<8x32xbf16, #tpu.memory_space<vmem>>, vector<8x32xbf16>
    %cst = arith.constant dense<0.000000e+00> : vector<8x8xf32>
    %5 = tpu.matmul %3, %4, %cst {dimension_numbers = #tpu.dot_dimension_numbers<[1], [1], [0], [0], [0, 0, 1, 0], [], []>} : vector<8x32xbf16>, vector<8x32xbf16>, vector<8x8xf32> -> vector<8x8xf32>
    %cst_4 = arith.constant 0.176776692 : f32
    %6 = vector.broadcast %cst_4 : f32 to vector<8x8xf32>
    %7 = arith.mulf %5, %6 : vector<8x8xf32>
    %c0_5 = arith.constant 0 : index
    %c0_6 = arith.constant 0 : index
    %8 = vector.load %arg14[%c0_5, %c0_6] : memref<8x1xf32, #tpu.memory_space<vmem>>, vector<8x1xf32>
    %cst_7 = arith.constant dense<0xFF800000> : vector<8xf32>
    %9 = vector.multi_reduction <maximumf>, %7, %cst_7 [1] : vector<8x8xf32> to vector<8xf32>
    %10 = vector.shape_cast %9 : vector<8xf32> to vector<8x1xf32>
    %11 = arith.maximumf %8, %10 : vector<8x1xf32>
    %12 = arith.subf %8, %11 : vector<8x1xf32>
    %13 = math.exp %12 : vector<8x1xf32>
    %14 = vector.broadcast %11 : vector<8x1xf32> to vector<8x8xf32>
    %15 = arith.subf %7, %14 : vector<8x8xf32>
    %16 = math.exp %15 : vector<8x8xf32>
    %c0_8 = arith.constant 0 : index
    %c0_9 = arith.constant 0 : index
    %17 = vector.load %arg14[%c0_8, %c0_9] : memref<8x1xf32, #tpu.memory_space<vmem>>, vector<8x1xf32>
    tpu.vector_store %arg14[%c0_8, %c0_9], %11 {strides = array<i32>} : memref<8x1xf32, #tpu.memory_space<vmem>>, vector<8x1xf32>,
    %c0_10 = arith.constant 0 : index
    %c0_11 = arith.constant 0 : index
    %18 = vector.load %arg15[%c0_10, %c0_11] : memref<8x33xf32, #tpu.memory_space<vmem>>, vector<8x33xf32>
    %19 = vector.broadcast %13 : vector<8x1xf32> to vector<8x33xf32>
    %20 = arith.mulf %19, %18 : vector<8x33xf32>
    %21 = arith.truncf %16 : vector<8x8xf32> to vector<8x8xbf16>
    %c0_12 = arith.constant 0 : index
    %c0_13 = arith.constant 0 : index
    %22 = vector.load %arg9[%c0_12, %c0_13] : memref<8x33xbf16, #tpu.memory_space<vmem>>, vector<8x33xbf16>
    %cst_14 = arith.constant dense<0.000000e+00> : vector<8x33xf32>
    %23 = tpu.matmul %21, %22, %cst_14 {dimension_numbers = #tpu.dot_dimension_numbers<[1], [0], [0], [1], [0, 0, 1, 1], [], []>} : vector<8x8xbf16>, vector<8x33xbf16>, vector<8x33xf32> -> vector<8x33xf32>
    %24 = arith.addf %20, %23 : vector<8x33xf32>
    %c0_15 = arith.constant 0 : index
    %c0_16 = arith.constant 0 : index
    %25 = vector.load %arg15[%c0_15, %c0_16] : memref<8x33xf32, #tpu.memory_space<vmem>>, vector<8x33xf32>
    tpu.vector_store %arg15[%c0_15, %c0_16], %24 {strides = array<i32>} : memref<8x33xf32, #tpu.memory_space<vmem>>, vector<8x33xf32>,
    %c0_17 = arith.constant 0 : index
    %c0_18 = arith.constant 0 : index
    %26 = vector.load %arg5[%c0_17, %c0_18] : memref<8x32xf32, #tpu.memory_space<vmem>>, vector<8x32xf32>
    %c0_19 = arith.constant 0 : index
    %c0_20 = arith.constant 0 : index
    %c0_21 = arith.constant 0 : index
    %27 = vector.load %arg11[%c0_19, %c0_20, %c0_21] : memref<1x32x8xf32, #tpu.memory_space<vmem>>, vector<1x32x8xf32>
    %28 = vector.shape_cast %27 : vector<1x32x8xf32> to vector<32x8xf32>
    %cst_22 = arith.constant 0.000000e+00 : f32
    %29 = vector.broadcast %cst_22 : f32 to vector<8x8xf32>
    %c0_23 = arith.constant 0 : index
    %30 = memref.load %arg3[%c0_23] : memref<1xf32, #tpu.memory_space<smem>>
    %31 = vector.broadcast %30 : f32 to vector<8x8xf32>
    %32 = arith.addf %29, %31 : vector<8x8xf32>
    %33 = vector.extract_strided_slice %26 {offsets = [0, 0], sizes = [8, 1], strides = [1, 1]} : vector<8x32xf32> to vector<8x1xf32>
    %34 = vector.extract_strided_slice %28 {offsets = [0, 0], sizes = [1, 8], strides = [1, 1]} : vector<32x8xf32> to vector<1x8xf32>
    %35 = vector.broadcast %33 : vector<8x1xf32> to vector<8x8xf32>
    %36 = vector.broadcast %34 : vector<1x8xf32> to vector<8x8xf32>
    %37 = arith.subf %35, %36 : vector<8x8xf32>
    %c0_24 = arith.constant 0 : index
    %38 = memref.load %arg2[%c0_24] : memref<32xf32, #tpu.memory_space<smem>>
    %cst_25 = arith.constant 0.000000e+00 : f32
    %39 = vector.broadcast %cst_25 : f32 to vector<8x8xf32>
    %40 = arith.maximumf %37, %39 : vector<8x8xf32>
    %41 = vector.broadcast %38 : f32 to vector<8x8xf32>
    %42 = arith.mulf %41, %40 : vector<8x8xf32>
    %43 = arith.addf %32, %42 : vector<8x8xf32>
    %44 = vector.extract_strided_slice %26 {offsets = [0, 1], sizes = [8, 1], strides = [1, 1]} : vector<8x32xf32> to vector<8x1xf32>
    %45 = vector.extract_strided_slice %28 {offsets = [1, 0], sizes = [1, 8], strides = [1, 1]} : vector<32x8xf32> to vector<1x8xf32>
    %46 = vector.broadcast %44 : vector<8x1xf32> to vector<8x8xf32>
    %47 = vector.broadcast %45 : vector<1x8xf32> to vector<8x8xf32>
    %48 = arith.subf %46, %47 : vector<8x8xf32>
    %c1 = arith.constant 1 : index
    %49 = memref.load %arg2[%c1] : memref<32xf32, #tpu.memory_space<smem>>
    %cst_26 = arith.constant 0.000000e+00 : f32
    %50 = vector.broadcast %cst_26 : f32 to vector<8x8xf32>
    %51 = arith.maximumf %48, %50 : vector<8x8xf32>
    %52 = vector.broadcast %49 : f32 to vector<8x8xf32>
    %53 = arith.mulf %52, %51 : vector<8x8xf32>
    %54 = arith.addf %43, %53 : vector<8x8xf32>
    %55 = vector.extract_strided_slice %26 {offsets = [0, 2], sizes = [8, 1], strides = [1, 1]} : vector<8x32xf32> to vector<8x1xf32>
    %56 = vector.extract_strided_slice %28 {offsets = [2, 0], sizes = [1, 8], strides = [1, 1]} : vector<32x8xf32> to vector<1x8xf32>
    %57 = vector.broadcast %55 : vector<8x1xf32> to vector<8x8xf32>
    %58 = vector.broadcast %56 : vector<1x8xf32> to vector<8x8xf32>
    %59 = arith.subf %57, %58 : vector<8x8xf32>
    %c2 = arith.constant 2 : index
    %60 = memref.load %arg2[%c2] : memref<32xf32, #tpu.memory_space<smem>>
    %cst_27 = arith.constant 0.000000e+00 : f32
    %61 = vector.broadcast %cst_27 : f32 to vector<8x8xf32>
    %62 = arith.maximumf %59, %61 : vector<8x8xf32>
    %63 = vector.broadcast %60 : f32 to vector<8x8xf32>
    %64 = arith.mulf %63, %62 : vector<8x8xf32>
    %65 = arith.addf %54, %64 : vector<8x8xf32>
    %66 = vector.extract_strided_slice %26 {offsets = [0, 3], sizes = [8, 1], strides = [1, 1]} : vector<8x32xf32> to vector<8x1xf32>
    %67 = vector.extract_strided_slice %28 {offsets = [3, 0], sizes = [1, 8], strides = [1, 1]} : vector<32x8xf32> to vector<1x8xf32>
    %68 = vector.broadcast %66 : vector<8x1xf32> to vector<8x8xf32>
    %69 = vector.broadcast %67 : vector<1x8xf32> to vector<8x8xf32>
    %70 = arith.subf %68, %69 : vector<8x8xf32>
    %c3 = arith.constant 3 : index
    %71 = memref.load %arg2[%c3] : memref<32xf32, #tpu.memory_space<smem>>
    %cst_28 = arith.constant 0.000000e+00 : f32
    %72 = vector.broadcast %cst_28 : f32 to vector<8x8xf32>
    %73 = arith.maximumf %70, %72 : vector<8x8xf32>
    %74 = vector.broadcast %71 : f32 to vector<8x8xf32>
    %75 = arith.mulf %74, %73 : vector<8x8xf32>
    %76 = arith.addf %65, %75 : vector<8x8xf32>
    %77 = vector.extract_strided_slice %26 {offsets = [0, 4], sizes = [8, 1], strides = [1, 1]} : vector<8x32xf32> to vector<8x1xf32>
    %78 = vector.extract_strided_slice %28 {offsets = [4, 0], sizes = [1, 8], strides = [1, 1]} : vector<32x8xf32> to vector<1x8xf32>
    %79 = vector.broadcast %77 : vector<8x1xf32> to vector<8x8xf32>
    %80 = vector.broadcast %78 : vector<1x8xf32> to vector<8x8xf32>
    %81 = arith.subf %79, %80 : vector<8x8xf32>
    %c4 = arith.constant 4 : index
    %82 = memref.load %arg2[%c4] : memref<32xf32, #tpu.memory_space<smem>>
    %cst_29 = arith.constant 0.000000e+00 : f32
    %83 = vector.broadcast %cst_29 : f32 to vector<8x8xf32>
    %84 = arith.maximumf %81, %83 : vector<8x8xf32>
    %85 = vector.broadcast %82 : f32 to vector<8x8xf32>
    %86 = arith.mulf %85, %84 : vector<8x8xf32>
    %87 = arith.addf %76, %86 : vector<8x8xf32>
    %88 = vector.extract_strided_slice %26 {offsets = [0, 5], sizes = [8, 1], strides = [1, 1]} : vector<8x32xf32> to vector<8x1xf32>
    %89 = vector.extract_strided_slice %28 {offsets = [5, 0], sizes = [1, 8], strides = [1, 1]} : vector<32x8xf32> to vector<1x8xf32>
    %90 = vector.broadcast %88 : vector<8x1xf32> to vector<8x8xf32>
    %91 = vector.broadcast %89 : vector<1x8xf32> to vector<8x8xf32>
    %92 = arith.subf %90, %91 : vector<8x8xf32>
    %c5 = arith.constant 5 : index
    %93 = memref.load %arg2[%c5] : memref<32xf32, #tpu.memory_space<smem>>
    %cst_30 = arith.constant 0.000000e+00 : f32
    %94 = vector.broadcast %cst_30 : f32 to vector<8x8xf32>
    %95 = arith.maximumf %92, %94 : vector<8x8xf32>
    %96 = vector.broadcast %93 : f32 to vector<8x8xf32>
    %97 = arith.mulf %96, %95 : vector<8x8xf32>
    %98 = arith.addf %87, %97 : vector<8x8xf32>
    %99 = vector.extract_strided_slice %26 {offsets = [0, 6], sizes = [8, 1], strides = [1, 1]} : vector<8x32xf32> to vector<8x1xf32>
    %100 = vector.extract_strided_slice %28 {offsets = [6, 0], sizes = [1, 8], strides = [1, 1]} : vector<32x8xf32> to vector<1x8xf32>
    %101 = vector.broadcast %99 : vector<8x1xf32> to vector<8x8xf32>
    %102 = vector.broadcast %100 : vector<1x8xf32> to vector<8x8xf32>
    %103 = arith.subf %101, %102 : vector<8x8xf32>
    %c6 = arith.constant 6 : index
    %104 = memref.load %arg2[%c6] : memref<32xf32, #tpu.memory_space<smem>>
    %cst_31 = arith.constant 0.000000e+00 : f32
    %105 = vector.broadcast %cst_31 : f32 to vector<8x8xf32>
    %106 = arith.maximumf %103, %105 : vector<8x8xf32>
    %107 = vector.broadcast %104 : f32 to vector<8x8xf32>
    %108 = arith.mulf %107, %106 : vector<8x8xf32>
    %109 = arith.addf %98, %108 : vector<8x8xf32>
    %110 = vector.extract_strided_slice %26 {offsets = [0, 7], sizes = [8, 1], strides = [1, 1]} : vector<8x32xf32> to vector<8x1xf32>
    %111 = vector.extract_strided_slice %28 {offsets = [7, 0], sizes = [1, 8], strides = [1, 1]} : vector<32x8xf32> to vector<1x8xf32>
    %112 = vector.broadcast %110 : vector<8x1xf32> to vector<8x8xf32>
    %113 = vector.broadcast %111 : vector<1x8xf32> to vector<8x8xf32>
    %114 = arith.subf %112, %113 : vector<8x8xf32>
    %c7 = arith.constant 7 : index
    %115 = memref.load %arg2[%c7] : memref<32xf32, #tpu.memory_space<smem>>
    %cst_32 = arith.constant 0.000000e+00 : f32
    %116 = vector.broadcast %cst_32 : f32 to vector<8x8xf32>
    %117 = arith.maximumf %114, %116 : vector<8x8xf32>
    %118 = vector.broadcast %115 : f32 to vector<8x8xf32>
    %119 = arith.mulf %118, %117 : vector<8x8xf32>
    %120 = arith.addf %109, %119 : vector<8x8xf32>
    %121 = vector.extract_strided_slice %26 {offsets = [0, 8], sizes = [8, 1], strides = [1, 1]} : vector<8x32xf32> to vector<8x1xf32>
    %122 = vector.extract_strided_slice %28 {offsets = [8, 0], sizes = [1, 8], strides = [1, 1]} : vector<32x8xf32> to vector<1x8xf32>
    %123 = vector.broadcast %121 : vector<8x1xf32> to vector<8x8xf32>
    %124 = vector.broadcast %122 : vector<1x8xf32> to vector<8x8xf32>
    %125 = arith.subf %123, %124 : vector<8x8xf32>
    %c8 = arith.constant 8 : index
    %126 = memref.load %arg2[%c8] : memref<32xf32, #tpu.memory_space<smem>>
    %cst_33 = arith.constant 0.000000e+00 : f32
    %127 = vector.broadcast %cst_33 : f32 to vector<8x8xf32>
    %128 = arith.maximumf %125, %127 : vector<8x8xf32>
    %129 = vector.broadcast %126 : f32 to vector<8x8xf32>
    %130 = arith.mulf %129, %128 : vector<8x8xf32>
    %131 = arith.addf %120, %130 : vector<8x8xf32>
    %132 = vector.extract_strided_slice %26 {offsets = [0, 9], sizes = [8, 1], strides = [1, 1]} : vector<8x32xf32> to vector<8x1xf32>
    %133 = vector.extract_strided_slice %28 {offsets = [9, 0], sizes = [1, 8], strides = [1, 1]} : vector<32x8xf32> to vector<1x8xf32>
    %134 = vector.broadcast %132 : vector<8x1xf32> to vector<8x8xf32>
    %135 = vector.broadcast %133 : vector<1x8xf32> to vector<8x8xf32>
    %136 = arith.subf %134, %135 : vector<8x8xf32>
    %c9 = arith.constant 9 : index
    %137 = memref.load %arg2[%c9] : memref<32xf32, #tpu.memory_space<smem>>
    %cst_34 = arith.constant 0.000000e+00 : f32
    %138 = vector.broadcast %cst_34 : f32 to vector<8x8xf32>
    %139 = arith.maximumf %136, %138 : vector<8x8xf32>
    %140 = vector.broadcast %137 : f32 to vector<8x8xf32>
    %141 = arith.mulf %140, %139 : vector<8x8xf32>
    %142 = arith.addf %131, %141 : vector<8x8xf32>
    %143 = vector.extract_strided_slice %26 {offsets = [0, 10], sizes = [8, 1], strides = [1, 1]} : vector<8x32xf32> to vector<8x1xf32>
    %144 = vector.extract_strided_slice %28 {offsets = [10, 0], sizes = [1, 8], strides = [1, 1]} : vector<32x8xf32> to vector<1x8xf32>
    %145 = vector.broadcast %143 : vector<8x1xf32> to vector<8x8xf32>
    %146 = vector.broadcast %144 : vector<1x8xf32> to vector<8x8xf32>
    %147 = arith.subf %145, %146 : vector<8x8xf32>
    %c10 = arith.constant 10 : index
    %148 = memref.load %arg2[%c10] : memref<32xf32, #tpu.memory_space<smem>>
    %cst_35 = arith.constant 0.000000e+00 : f32
    %149 = vector.broadcast %cst_35 : f32 to vector<8x8xf32>
    %150 = arith.maximumf %147, %149 : vector<8x8xf32>
    %151 = vector.broadcast %148 : f32 to vector<8x8xf32>
    %152 = arith.mulf %151, %150 : vector<8x8xf32>
    %153 = arith.addf %142, %152 : vector<8x8xf32>
    %154 = vector.extract_strided_slice %26 {offsets = [0, 11], sizes = [8, 1], strides = [1, 1]} : vector<8x32xf32> to vector<8x1xf32>
    %155 = vector.extract_strided_slice %28 {offsets = [11, 0], sizes = [1, 8], strides = [1, 1]} : vector<32x8xf32> to vector<1x8xf32>
    %156 = vector.broadcast %154 : vector<8x1xf32> to vector<8x8xf32>
    %157 = vector.broadcast %155 : vector<1x8xf32> to vector<8x8xf32>
    %158 = arith.subf %156, %157 : vector<8x8xf32>
    %c11 = arith.constant 11 : index
    %159 = memref.load %arg2[%c11] : memref<32xf32, #tpu.memory_space<smem>>
    %cst_36 = arith.constant 0.000000e+00 : f32
    %160 = vector.broadcast %cst_36 : f32 to vector<8x8xf32>
    %161 = arith.maximumf %158, %160 : vector<8x8xf32>
    %162 = vector.broadcast %159 : f32 to vector<8x8xf32>
    %163 = arith.mulf %162, %161 : vector<8x8xf32>
    %164 = arith.addf %153, %163 : vector<8x8xf32>
    %165 = vector.extract_strided_slice %26 {offsets = [0, 12], sizes = [8, 1], strides = [1, 1]} : vector<8x32xf32> to vector<8x1xf32>
    %166 = vector.extract_strided_slice %28 {offsets = [12, 0], sizes = [1, 8], strides = [1, 1]} : vector<32x8xf32> to vector<1x8xf32>
    %167 = vector.broadcast %165 : vector<8x1xf32> to vector<8x8xf32>
    %168 = vector.broadcast %166 : vector<1x8xf32> to vector<8x8xf32>
    %169 = arith.subf %167, %168 : vector<8x8xf32>
    %c12 = arith.constant 12 : index
    %170 = memref.load %arg2[%c12] : memref<32xf32, #tpu.memory_space<smem>>
    %cst_37 = arith.constant 0.000000e+00 : f32
    %171 = vector.broadcast %cst_37 : f32 to vector<8x8xf32>
    %172 = arith.maximumf %169, %171 : vector<8x8xf32>
    %173 = vector.broadcast %170 : f32 to vector<8x8xf32>
    %174 = arith.mulf %173, %172 : vector<8x8xf32>
    %175 = arith.addf %164, %174 : vector<8x8xf32>
    %176 = vector.extract_strided_slice %26 {offsets = [0, 13], sizes = [8, 1], strides = [1, 1]} : vector<8x32xf32> to vector<8x1xf32>
    %177 = vector.extract_strided_slice %28 {offsets = [13, 0], sizes = [1, 8], strides = [1, 1]} : vector<32x8xf32> to vector<1x8xf32>
    %178 = vector.broadcast %176 : vector<8x1xf32> to vector<8x8xf32>
    %179 = vector.broadcast %177 : vector<1x8xf32> to vector<8x8xf32>
    %180 = arith.subf %178, %179 : vector<8x8xf32>
    %c13 = arith.constant 13 : index
    %181 = memref.load %arg2[%c13] : memref<32xf32, #tpu.memory_space<smem>>
    %cst_38 = arith.constant 0.000000e+00 : f32
    %182 = vector.broadcast %cst_38 : f32 to vector<8x8xf32>
    %183 = arith.maximumf %180, %182 : vector<8x8xf32>
    %184 = vector.broadcast %181 : f32 to vector<8x8xf32>
    %185 = arith.mulf %184, %183 : vector<8x8xf32>
    %186 = arith.addf %175, %185 : vector<8x8xf32>
    %187 = vector.extract_strided_slice %26 {offsets = [0, 14], sizes = [8, 1], strides = [1, 1]} : vector<8x32xf32> to vector<8x1xf32>
    %188 = vector.extract_strided_slice %28 {offsets = [14, 0], sizes = [1, 8], strides = [1, 1]} : vector<32x8xf32> to vector<1x8xf32>
    %189 = vector.broadcast %187 : vector<8x1xf32> to vector<8x8xf32>
    %190 = vector.broadcast %188 : vector<1x8xf32> to vector<8x8xf32>
    %191 = arith.subf %189, %190 : vector<8x8xf32>
    %c14 = arith.constant 14 : index
    %192 = memref.load %arg2[%c14] : memref<32xf32, #tpu.memory_space<smem>>
    %cst_39 = arith.constant 0.000000e+00 : f32
    %193 = vector.broadcast %cst_39 : f32 to vector<8x8xf32>
    %194 = arith.maximumf %191, %193 : vector<8x8xf32>
    %195 = vector.broadcast %192 : f32 to vector<8x8xf32>
    %196 = arith.mulf %195, %194 : vector<8x8xf32>
    %197 = arith.addf %186, %196 : vector<8x8xf32>
    %198 = vector.extract_strided_slice %26 {offsets = [0, 15], sizes = [8, 1], strides = [1, 1]} : vector<8x32xf32> to vector<8x1xf32>
    %199 = vector.extract_strided_slice %28 {offsets = [15, 0], sizes = [1, 8], strides = [1, 1]} : vector<32x8xf32> to vector<1x8xf32>
    %200 = vector.broadcast %198 : vector<8x1xf32> to vector<8x8xf32>
    %201 = vector.broadcast %199 : vector<1x8xf32> to vector<8x8xf32>
    %202 = arith.subf %200, %201 : vector<8x8xf32>
    %c15 = arith.constant 15 : index
    %203 = memref.load %arg2[%c15] : memref<32xf32, #tpu.memory_space<smem>>
    %cst_40 = arith.constant 0.000000e+00 : f32
    %204 = vector.broadcast %cst_40 : f32 to vector<8x8xf32>
    %205 = arith.maximumf %202, %204 : vector<8x8xf32>
    %206 = vector.broadcast %203 : f32 to vector<8x8xf32>
    %207 = arith.mulf %206, %205 : vector<8x8xf32>
    %208 = arith.addf %197, %207 : vector<8x8xf32>
    %209 = vector.extract_strided_slice %26 {offsets = [0, 16], sizes = [8, 1], strides = [1, 1]} : vector<8x32xf32> to vector<8x1xf32>
    %210 = vector.extract_strided_slice %28 {offsets = [16, 0], sizes = [1, 8], strides = [1, 1]} : vector<32x8xf32> to vector<1x8xf32>
    %211 = vector.broadcast %209 : vector<8x1xf32> to vector<8x8xf32>
    %212 = vector.broadcast %210 : vector<1x8xf32> to vector<8x8xf32>
    %213 = arith.subf %211, %212 : vector<8x8xf32>
    %c16 = arith.constant 16 : index
    %214 = memref.load %arg2[%c16] : memref<32xf32, #tpu.memory_space<smem>>
    %cst_41 = arith.constant 0.000000e+00 : f32
    %215 = vector.broadcast %cst_41 : f32 to vector<8x8xf32>
    %216 = arith.maximumf %213, %215 : vector<8x8xf32>
    %217 = vector.broadcast %214 : f32 to vector<8x8xf32>
    %218 = arith.mulf %217, %216 : vector<8x8xf32>
    %219 = arith.addf %208, %218 : vector<8x8xf32>
    %220 = vector.extract_strided_slice %26 {offsets = [0, 17], sizes = [8, 1], strides = [1, 1]} : vector<8x32xf32> to vector<8x1xf32>
    %221 = vector.extract_strided_slice %28 {offsets = [17, 0], sizes = [1, 8], strides = [1, 1]} : vector<32x8xf32> to vector<1x8xf32>
    %222 = vector.broadcast %220 : vector<8x1xf32> to vector<8x8xf32>
    %223 = vector.broadcast %221 : vector<1x8xf32> to vector<8x8xf32>
    %224 = arith.subf %222, %223 : vector<8x8xf32>
    %c17 = arith.constant 17 : index
    %225 = memref.load %arg2[%c17] : memref<32xf32, #tpu.memory_space<smem>>
    %cst_42 = arith.constant 0.000000e+00 : f32
    %226 = vector.broadcast %cst_42 : f32 to vector<8x8xf32>
    %227 = arith.maximumf %224, %226 : vector<8x8xf32>
    %228 = vector.broadcast %225 : f32 to vector<8x8xf32>
    %229 = arith.mulf %228, %227 : vector<8x8xf32>
    %230 = arith.addf %219, %229 : vector<8x8xf32>
    %231 = vector.extract_strided_slice %26 {offsets = [0, 18], sizes = [8, 1], strides = [1, 1]} : vector<8x32xf32> to vector<8x1xf32>
    %232 = vector.extract_strided_slice %28 {offsets = [18, 0], sizes = [1, 8], strides = [1, 1]} : vector<32x8xf32> to vector<1x8xf32>
    %233 = vector.broadcast %231 : vector<8x1xf32> to vector<8x8xf32>
    %234 = vector.broadcast %232 : vector<1x8xf32> to vector<8x8xf32>
    %235 = arith.subf %233, %234 : vector<8x8xf32>
    %c18 = arith.constant 18 : index
    %236 = memref.load %arg2[%c18] : memref<32xf32, #tpu.memory_space<smem>>
    %cst_43 = arith.constant 0.000000e+00 : f32
    %237 = vector.broadcast %cst_43 : f32 to vector<8x8xf32>
    %238 = arith.maximumf %235, %237 : vector<8x8xf32>
    %239 = vector.broadcast %236 : f32 to vector<8x8xf32>
    %240 = arith.mulf %239, %238 : vector<8x8xf32>
    %241 = arith.addf %230, %240 : vector<8x8xf32>
    %242 = vector.extract_strided_slice %26 {offsets = [0, 19], sizes = [8, 1], strides = [1, 1]} : vector<8x32xf32> to vector<8x1xf32>
    %243 = vector.extract_strided_slice %28 {offsets = [19, 0], sizes = [1, 8], strides = [1, 1]} : vector<32x8xf32> to vector<1x8xf32>
    %244 = vector.broadcast %242 : vector<8x1xf32> to vector<8x8xf32>
    %245 = vector.broadcast %243 : vector<1x8xf32> to vector<8x8xf32>
    %246 = arith.subf %244, %245 : vector<8x8xf32>
    %c19 = arith.constant 19 : index
    %247 = memref.load %arg2[%c19] : memref<32xf32, #tpu.memory_space<smem>>
    %cst_44 = arith.constant 0.000000e+00 : f32
    %248 = vector.broadcast %cst_44 : f32 to vector<8x8xf32>
    %249 = arith.maximumf %246, %248 : vector<8x8xf32>
    %250 = vector.broadcast %247 : f32 to vector<8x8xf32>
    %251 = arith.mulf %250, %249 : vector<8x8xf32>
    %252 = arith.addf %241, %251 : vector<8x8xf32>
    %253 = vector.extract_strided_slice %26 {offsets = [0, 20], sizes = [8, 1], strides = [1, 1]} : vector<8x32xf32> to vector<8x1xf32>
    %254 = vector.extract_strided_slice %28 {offsets = [20, 0], sizes = [1, 8], strides = [1, 1]} : vector<32x8xf32> to vector<1x8xf32>
    %255 = vector.broadcast %253 : vector<8x1xf32> to vector<8x8xf32>
    %256 = vector.broadcast %254 : vector<1x8xf32> to vector<8x8xf32>
    %257 = arith.subf %255, %256 : vector<8x8xf32>
    %c20 = arith.constant 20 : index
    %258 = memref.load %arg2[%c20] : memref<32xf32, #tpu.memory_space<smem>>
    %cst_45 = arith.constant 0.000000e+00 : f32
    %259 = vector.broadcast %cst_45 : f32 to vector<8x8xf32>
    %260 = arith.maximumf %257, %259 : vector<8x8xf32>
    %261 = vector.broadcast %258 : f32 to vector<8x8xf32>
    %262 = arith.mulf %261, %260 : vector<8x8xf32>
    %263 = arith.addf %252, %262 : vector<8x8xf32>
    %264 = vector.extract_strided_slice %26 {offsets = [0, 21], sizes = [8, 1], strides = [1, 1]} : vector<8x32xf32> to vector<8x1xf32>
    %265 = vector.extract_strided_slice %28 {offsets = [21, 0], sizes = [1, 8], strides = [1, 1]} : vector<32x8xf32> to vector<1x8xf32>
    %266 = vector.broadcast %264 : vector<8x1xf32> to vector<8x8xf32>
    %267 = vector.broadcast %265 : vector<1x8xf32> to vector<8x8xf32>
    %268 = arith.subf %266, %267 : vector<8x8xf32>
    %c21 = arith.constant 21 : index
    %269 = memref.load %arg2[%c21] : memref<32xf32, #tpu.memory_space<smem>>
    %cst_46 = arith.constant 0.000000e+00 : f32
    %270 = vector.broadcast %cst_46 : f32 to vector<8x8xf32>
    %271 = arith.maximumf %268, %270 : vector<8x8xf32>
    %272 = vector.broadcast %269 : f32 to vector<8x8xf32>
    %273 = arith.mulf %272, %271 : vector<8x8xf32>
    %274 = arith.addf %263, %273 : vector<8x8xf32>
    %275 = vector.extract_strided_slice %26 {offsets = [0, 22], sizes = [8, 1], strides = [1, 1]} : vector<8x32xf32> to vector<8x1xf32>
    %276 = vector.extract_strided_slice %28 {offsets = [22, 0], sizes = [1, 8], strides = [1, 1]} : vector<32x8xf32> to vector<1x8xf32>
    %277 = vector.broadcast %275 : vector<8x1xf32> to vector<8x8xf32>
    %278 = vector.broadcast %276 : vector<1x8xf32> to vector<8x8xf32>
    %279 = arith.subf %277, %278 : vector<8x8xf32>
    %c22 = arith.constant 22 : index
    %280 = memref.load %arg2[%c22] : memref<32xf32, #tpu.memory_space<smem>>
    %cst_47 = arith.constant 0.000000e+00 : f32
    %281 = vector.broadcast %cst_47 : f32 to vector<8x8xf32>
    %282 = arith.maximumf %279, %281 : vector<8x8xf32>
    %283 = vector.broadcast %280 : f32 to vector<8x8xf32>
    %284 = arith.mulf %283, %282 : vector<8x8xf32>
    %285 = arith.addf %274, %284 : vector<8x8xf32>
    %286 = vector.extract_strided_slice %26 {offsets = [0, 23], sizes = [8, 1], strides = [1, 1]} : vector<8x32xf32> to vector<8x1xf32>
    %287 = vector.extract_strided_slice %28 {offsets = [23, 0], sizes = [1, 8], strides = [1, 1]} : vector<32x8xf32> to vector<1x8xf32>
    %288 = vector.broadcast %286 : vector<8x1xf32> to vector<8x8xf32>
    %289 = vector.broadcast %287 : vector<1x8xf32> to vector<8x8xf32>
    %290 = arith.subf %288, %289 : vector<8x8xf32>
    %c23 = arith.constant 23 : index
    %291 = memref.load %arg2[%c23] : memref<32xf32, #tpu.memory_space<smem>>
    %cst_48 = arith.constant 0.000000e+00 : f32
    %292 = vector.broadcast %cst_48 : f32 to vector<8x8xf32>
    %293 = arith.maximumf %290, %292 : vector<8x8xf32>
    %294 = vector.broadcast %291 : f32 to vector<8x8xf32>
    %295 = arith.mulf %294, %293 : vector<8x8xf32>
    %296 = arith.addf %285, %295 : vector<8x8xf32>
    %297 = vector.extract_strided_slice %26 {offsets = [0, 24], sizes = [8, 1], strides = [1, 1]} : vector<8x32xf32> to vector<8x1xf32>
    %298 = vector.extract_strided_slice %28 {offsets = [24, 0], sizes = [1, 8], strides = [1, 1]} : vector<32x8xf32> to vector<1x8xf32>
    %299 = vector.broadcast %297 : vector<8x1xf32> to vector<8x8xf32>
    %300 = vector.broadcast %298 : vector<1x8xf32> to vector<8x8xf32>
    %301 = arith.subf %299, %300 : vector<8x8xf32>
    %c24 = arith.constant 24 : index
    %302 = memref.load %arg2[%c24] : memref<32xf32, #tpu.memory_space<smem>>
    %cst_49 = arith.constant 0.000000e+00 : f32
    %303 = vector.broadcast %cst_49 : f32 to vector<8x8xf32>
    %304 = arith.maximumf %301, %303 : vector<8x8xf32>
    %305 = vector.broadcast %302 : f32 to vector<8x8xf32>
    %306 = arith.mulf %305, %304 : vector<8x8xf32>
    %307 = arith.addf %296, %306 : vector<8x8xf32>
    %308 = vector.extract_strided_slice %26 {offsets = [0, 25], sizes = [8, 1], strides = [1, 1]} : vector<8x32xf32> to vector<8x1xf32>
    %309 = vector.extract_strided_slice %28 {offsets = [25, 0], sizes = [1, 8], strides = [1, 1]} : vector<32x8xf32> to vector<1x8xf32>
    %310 = vector.broadcast %308 : vector<8x1xf32> to vector<8x8xf32>
    %311 = vector.broadcast %309 : vector<1x8xf32> to vector<8x8xf32>
    %312 = arith.subf %310, %311 : vector<8x8xf32>
    %c25 = arith.constant 25 : index
    %313 = memref.load %arg2[%c25] : memref<32xf32, #tpu.memory_space<smem>>
    %cst_50 = arith.constant 0.000000e+00 : f32
    %314 = vector.broadcast %cst_50 : f32 to vector<8x8xf32>
    %315 = arith.maximumf %312, %314 : vector<8x8xf32>
    %316 = vector.broadcast %313 : f32 to vector<8x8xf32>
    %317 = arith.mulf %316, %315 : vector<8x8xf32>
    %318 = arith.addf %307, %317 : vector<8x8xf32>
    %319 = vector.extract_strided_slice %26 {offsets = [0, 26], sizes = [8, 1], strides = [1, 1]} : vector<8x32xf32> to vector<8x1xf32>
    %320 = vector.extract_strided_slice %28 {offsets = [26, 0], sizes = [1, 8], strides = [1, 1]} : vector<32x8xf32> to vector<1x8xf32>
    %321 = vector.broadcast %319 : vector<8x1xf32> to vector<8x8xf32>
    %322 = vector.broadcast %320 : vector<1x8xf32> to vector<8x8xf32>
    %323 = arith.subf %321, %322 : vector<8x8xf32>
    %c26 = arith.constant 26 : index
    %324 = memref.load %arg2[%c26] : memref<32xf32, #tpu.memory_space<smem>>
    %cst_51 = arith.constant 0.000000e+00 : f32
    %325 = vector.broadcast %cst_51 : f32 to vector<8x8xf32>
    %326 = arith.maximumf %323, %325 : vector<8x8xf32>
    %327 = vector.broadcast %324 : f32 to vector<8x8xf32>
    %328 = arith.mulf %327, %326 : vector<8x8xf32>
    %329 = arith.addf %318, %328 : vector<8x8xf32>
    %330 = vector.extract_strided_slice %26 {offsets = [0, 27], sizes = [8, 1], strides = [1, 1]} : vector<8x32xf32> to vector<8x1xf32>
    %331 = vector.extract_strided_slice %28 {offsets = [27, 0], sizes = [1, 8], strides = [1, 1]} : vector<32x8xf32> to vector<1x8xf32>
    %332 = vector.broadcast %330 : vector<8x1xf32> to vector<8x8xf32>
    %333 = vector.broadcast %331 : vector<1x8xf32> to vector<8x8xf32>
    %334 = arith.subf %332, %333 : vector<8x8xf32>
    %c27 = arith.constant 27 : index
    %335 = memref.load %arg2[%c27] : memref<32xf32, #tpu.memory_space<smem>>
    %cst_52 = arith.constant 0.000000e+00 : f32
    %336 = vector.broadcast %cst_52 : f32 to vector<8x8xf32>
    %337 = arith.maximumf %334, %336 : vector<8x8xf32>
    %338 = vector.broadcast %335 : f32 to vector<8x8xf32>
    %339 = arith.mulf %338, %337 : vector<8x8xf32>
    %340 = arith.addf %329, %339 : vector<8x8xf32>
    %341 = vector.extract_strided_slice %26 {offsets = [0, 28], sizes = [8, 1], strides = [1, 1]} : vector<8x32xf32> to vector<8x1xf32>
    %342 = vector.extract_strided_slice %28 {offsets = [28, 0], sizes = [1, 8], strides = [1, 1]} : vector<32x8xf32> to vector<1x8xf32>
    %343 = vector.broadcast %341 : vector<8x1xf32> to vector<8x8xf32>
    %344 = vector.broadcast %342 : vector<1x8xf32> to vector<8x8xf32>
    %345 = arith.subf %343, %344 : vector<8x8xf32>
    %c28 = arith.constant 28 : index
    %346 = memref.load %arg2[%c28] : memref<32xf32, #tpu.memory_space<smem>>
    %cst_53 = arith.constant 0.000000e+00 : f32
    %347 = vector.broadcast %cst_53 : f32 to vector<8x8xf32>
    %348 = arith.maximumf %345, %347 : vector<8x8xf32>
    %349 = vector.broadcast %346 : f32 to vector<8x8xf32>
    %350 = arith.mulf %349, %348 : vector<8x8xf32>
    %351 = arith.addf %340, %350 : vector<8x8xf32>
    %352 = vector.extract_strided_slice %26 {offsets = [0, 29], sizes = [8, 1], strides = [1, 1]} : vector<8x32xf32> to vector<8x1xf32>
    %353 = vector.extract_strided_slice %28 {offsets = [29, 0], sizes = [1, 8], strides = [1, 1]} : vector<32x8xf32> to vector<1x8xf32>
    %354 = vector.broadcast %352 : vector<8x1xf32> to vector<8x8xf32>
    %355 = vector.broadcast %353 : vector<1x8xf32> to vector<8x8xf32>
    %356 = arith.subf %354, %355 : vector<8x8xf32>
    %c29 = arith.constant 29 : index
    %357 = memref.load %arg2[%c29] : memref<32xf32, #tpu.memory_space<smem>>
    %cst_54 = arith.constant 0.000000e+00 : f32
    %358 = vector.broadcast %cst_54 : f32 to vector<8x8xf32>
    %359 = arith.maximumf %356, %358 : vector<8x8xf32>
    %360 = vector.broadcast %357 : f32 to vector<8x8xf32>
    %361 = arith.mulf %360, %359 : vector<8x8xf32>
    %362 = arith.addf %351, %361 : vector<8x8xf32>
    %363 = vector.extract_strided_slice %26 {offsets = [0, 30], sizes = [8, 1], strides = [1, 1]} : vector<8x32xf32> to vector<8x1xf32>
    %364 = vector.extract_strided_slice %28 {offsets = [30, 0], sizes = [1, 8], strides = [1, 1]} : vector<32x8xf32> to vector<1x8xf32>
    %365 = vector.broadcast %363 : vector<8x1xf32> to vector<8x8xf32>
    %366 = vector.broadcast %364 : vector<1x8xf32> to vector<8x8xf32>
    %367 = arith.subf %365, %366 : vector<8x8xf32>
    %c30 = arith.constant 30 : index
    %368 = memref.load %arg2[%c30] : memref<32xf32, #tpu.memory_space<smem>>
    %cst_55 = arith.constant 0.000000e+00 : f32
    %369 = vector.broadcast %cst_55 : f32 to vector<8x8xf32>
    %370 = arith.maximumf %367, %369 : vector<8x8xf32>
    %371 = vector.broadcast %368 : f32 to vector<8x8xf32>
    %372 = arith.mulf %371, %370 : vector<8x8xf32>
    %373 = arith.addf %362, %372 : vector<8x8xf32>
    %374 = vector.extract_strided_slice %26 {offsets = [0, 31], sizes = [8, 1], strides = [1, 1]} : vector<8x32xf32> to vector<8x1xf32>
    %375 = vector.extract_strided_slice %28 {offsets = [31, 0], sizes = [1, 8], strides = [1, 1]} : vector<32x8xf32> to vector<1x8xf32>
    %376 = vector.broadcast %374 : vector<8x1xf32> to vector<8x8xf32>
    %377 = vector.broadcast %375 : vector<1x8xf32> to vector<8x8xf32>
    %378 = arith.subf %376, %377 : vector<8x8xf32>
    %c31 = arith.constant 31 : index
    %379 = memref.load %arg2[%c31] : memref<32xf32, #tpu.memory_space<smem>>
    %cst_56 = arith.constant 0.000000e+00 : f32
    %380 = vector.broadcast %cst_56 : f32 to vector<8x8xf32>
    %381 = arith.maximumf %378, %380 : vector<8x8xf32>
    %382 = vector.broadcast %379 : f32 to vector<8x8xf32>
    %383 = arith.mulf %382, %381 : vector<8x8xf32>
    %384 = arith.addf %373, %383 : vector<8x8xf32>
    %385 = arith.mulf %16, %384 : vector<8x8xf32>
    %386 = arith.truncf %385 : vector<8x8xf32> to vector<8x8xbf16>
    %c0_57 = arith.constant 0 : index
    %c0_58 = arith.constant 0 : index
    %387 = vector.load %arg16[%c0_57, %c0_58] : memref<8x3xf32, #tpu.memory_space<vmem>>, vector<8x3xf32>
    %388 = vector.broadcast %13 : vector<8x1xf32> to vector<8x3xf32>
    %389 = arith.mulf %388, %387 : vector<8x3xf32>
    %c0_59 = arith.constant 0 : index
    %c0_60 = arith.constant 0 : index
    %390 = vector.load %arg10[%c0_59, %c0_60] : memref<8x3xbf16, #tpu.memory_space<vmem>>, vector<8x3xbf16>
    %cst_61 = arith.constant dense<0.000000e+00> : vector<8x3xf32>
    %391 = tpu.matmul %386, %390, %cst_61 {dimension_numbers = #tpu.dot_dimension_numbers<[1], [0], [0], [1], [0, 0, 1, 1], [], []>} : vector<8x8xbf16>, vector<8x3xbf16>, vector<8x3xf32> -> vector<8x3xf32>
    %392 = arith.addf %389, %391 : vector<8x3xf32>
    %c0_62 = arith.constant 0 : index
    %c0_63 = arith.constant 0 : index
    %393 = vector.load %arg16[%c0_62, %c0_63] : memref<8x3xf32, #tpu.memory_space<vmem>>, vector<8x3xf32>
    tpu.vector_store %arg16[%c0_62, %c0_63], %392 {strides = array<i32>} : memref<8x3xf32, #tpu.memory_space<vmem>>, vector<8x3xf32>,
    %c0_i32_64 = arith.constant 0 : i32
    %394 = arith.cmpi eq, %arg1, %c0_i32_64 : i32
    %395 = arith.extui %394 : i1 to i32
    %c0_i32_65 = arith.constant 0 : i32
    %396 = arith.cmpi ne, %395, %c0_i32_65 : i32
    scf.if %396 {
      %c0_66 = arith.constant 0 : index
      %c0_67 = arith.constant 0 : index
      %397 = vector.load %arg15[%c0_66, %c0_67] : memref<8x33xf32, #tpu.memory_space<vmem>>, vector<8x33xf32>
      %398 = vector.extract_strided_slice %397 {offsets = [0, 32], sizes = [8, 1], strides = [1, 1]} : vector<8x33xf32> to vector<8x1xf32>
      %cst_68 = arith.constant 1.000000e+00 : f32
      %399 = vector.broadcast %cst_68 : f32 to vector<8x1xf32>
      %400 = arith.divf %399, %398 : vector<8x1xf32>
      %c0_69 = arith.constant 0 : index
      %c0_70 = arith.constant 0 : index
      %401 = vector.load %arg6[%c0_69, %c0_70] : memref<8x32xf32, #tpu.memory_space<vmem>>, vector<8x32xf32>
      %402 = vector.extract_strided_slice %397 {offsets = [0, 0], sizes = [8, 32], strides = [1, 1]} : vector<8x33xf32> to vector<8x32xf32>
      %403 = vector.broadcast %400 : vector<8x1xf32> to vector<8x32xf32>
      %404 = arith.mulf %402, %403 : vector<8x32xf32>
      %405 = arith.addf %401, %404 : vector<8x32xf32>
      %c0_71 = arith.constant 0 : index
      %c0_72 = arith.constant 0 : index
      %406 = vector.load %arg12[%c0_71, %c0_72] : memref<8x32xf32, #tpu.memory_space<vmem>>, vector<8x32xf32>
      tpu.vector_store %arg12[%c0_71, %c0_72], %405 {strides = array<i32>} : memref<8x32xf32, #tpu.memory_space<vmem>>, vector<8x32xf32>,
      %c0_73 = arith.constant 0 : index
      %c0_74 = arith.constant 0 : index
      %407 = vector.load %arg16[%c0_73, %c0_74] : memref<8x3xf32, #tpu.memory_space<vmem>>, vector<8x3xf32>
      %c0_75 = arith.constant 0 : index
      %c0_76 = arith.constant 0 : index
      %408 = vector.load %arg7[%c0_75, %c0_76] : memref<8x2xf32, #tpu.memory_space<vmem>>, vector<8x2xf32>
      %409 = vector.extract_strided_slice %407 {offsets = [0, 2], sizes = [8, 1], strides = [1, 1]} : vector<8x3xf32> to vector<8x1xf32>
      %410 = vector.broadcast %409 : vector<8x1xf32> to vector<8x2xf32>
      %411 = arith.mulf %408, %410 : vector<8x2xf32>
      %412 = vector.extract_strided_slice %407 {offsets = [0, 0], sizes = [8, 2], strides = [1, 1]} : vector<8x3xf32> to vector<8x2xf32>
      %413 = arith.subf %411, %412 : vector<8x2xf32>
      %414 = vector.broadcast %400 : vector<8x1xf32> to vector<8x2xf32>
      %415 = arith.mulf %413, %414 : vector<8x2xf32>
      %416 = arith.addf %408, %415 : vector<8x2xf32>
      %c0_77 = arith.constant 0 : index
      %c0_78 = arith.constant 0 : index
      %417 = vector.load %arg13[%c0_77, %c0_78] : memref<8x2xf32, #tpu.memory_space<vmem>>, vector<8x2xf32>
      tpu.vector_store %arg13[%c0_77, %c0_78], %416 {strides = array<i32>} : memref<8x2xf32, #tpu.memory_space<vmem>>, vector<8x2xf32>,
    } else {
    }
    return
  }
  func.func @transform_0(%arg0: i32, %arg1: i32) -> i32 {
    %c0_i32 = arith.constant 0 : i32
    %c0_i32_0 = arith.constant 0 : i32
    return %c0_i32 : i32
  }
  func.func @transform_1(%arg0: i32, %arg1: i32) -> i32 {
    %c0_i32 = arith.constant 0 : i32
    %c0_i32_0 = arith.constant 0 : i32
    return %c0_i32 : i32
  }
  func.func @transform_2(%arg0: i32, %arg1: i32) -> (i32, i32) {
    %c0_i32 = arith.constant 0 : i32
    %c0_i32_0 = arith.constant 0 : i32
    return %arg0, %c0_i32 : i32, i32
  }
  func.func @transform_3(%arg0: i32, %arg1: i32) -> (i32, i32) {
    %c0_i32 = arith.constant 0 : i32
    %c0_i32_0 = arith.constant 0 : i32
    return %arg0, %c0_i32 : i32, i32
  }
  func.func @transform_4(%arg0: i32, %arg1: i32) -> (i32, i32) {
    %c0_i32 = arith.constant 0 : i32
    %c0_i32_0 = arith.constant 0 : i32
    return %arg0, %c0_i32 : i32, i32
  }
  func.func @transform_5(%arg0: i32, %arg1: i32) -> (i32, i32) {
    %c0_i32 = arith.constant 0 : i32
    %c0_i32_0 = arith.constant 0 : i32
    return %arg0, %c0_i32 : i32, i32
  }
  func.func @transform_6(%arg0: i32, %arg1: i32) -> (i32, i32) {
    %c0_i32 = arith.constant 0 : i32
    %c0_i32_0 = arith.constant 0 : i32
    return %arg1, %c0_i32 : i32, i32
  }
  func.func @transform_7(%arg0: i32, %arg1: i32) -> (i32, i32) {
    %c0_i32 = arith.constant 0 : i32
    %c0_i32_0 = arith.constant 0 : i32
    return %arg1, %c0_i32 : i32, i32
  }
  func.func @transform_8(%arg0: i32, %arg1: i32) -> (i32, i32) {
    %c0_i32 = arith.constant 0 : i32
    %c0_i32_0 = arith.constant 0 : i32
    return %arg1, %c0_i32 : i32, i32
  }
  func.func @transform_9(%arg0: i32, %arg1: i32) -> (i32, i32, i32) {
    %c0_i32 = arith.constant 0 : i32
    %c0_i32_0 = arith.constant 0 : i32
    %c0_i32_1 = arith.constant 0 : i32
    return %arg1, %c0_i32, %c0_i32_0 : i32, i32, i32
  }
  func.func @transform_10(%arg0: i32, %arg1: i32) -> (i32, i32) {
    %c0_i32 = arith.constant 0 : i32
    %c0_i32_0 = arith.constant 0 : i32
    return %arg0, %c0_i32 : i32, i32
  }
  func.func @transform_11(%arg0: i32, %arg1: i32) -> (i32, i32) {
    %c0_i32 = arith.constant 0 : i32
    %c0_i32_0 = arith.constant 0 : i32
    return %arg0, %c0_i32 : i32, i32
  }
}

</mosaic_0001>

<llo_original>
// kernel: tpu_custom_call.1
$region0: #{tpu_custom_call.1}
  #allocation0 [shape = 'u32[]', space=smem, size = 0x4, offset = 0x4, fixed_abs, tag = 'smem constant byte address 0x4 - core index']
  #allocation1 [shape = 'u32[144,128]{1,0:T(1,128)}', space=vmem, size = 0x12000, scoped, tag = 'internal scratch']
  #allocation2 [shape = 'f32[8,1]{1,0:T(8,128)}', space=vmem, size = 0x1000, scoped, tag = 'scratch operand']
  #allocation3 [shape = 'f32[8,33]{1,0:T(8,128)}', space=vmem, size = 0x1000, scoped, tag = 'scratch operand']
  #allocation4 [shape = 'f32[8,3]{1,0:T(8,128)}', space=vmem, size = 0x1000, scoped, tag = 'scratch operand']
  #allocation5 [shape = 'f32[1]{0:T(128)S(6)}', space=smem, size = 0x200, scoped, tag = 'scoped memory for tpu_custom_call.1']
  %s0 = inlined_call_operand.vmem [shape: f32[32], index: 0, kind: input, shape index: {}]
  %s1 = inlined_call_operand.<no memory space> [shape: f32[1], index: 1, kind: input, shape index: {}]
  %s2 = inlined_call_operand.vmem [shape: bf16[8,32], index: 2, kind: input, shape index: {}]
  %s3 = inlined_call_operand.vmem [shape: f32[8,32], index: 3, kind: input, shape index: {}]
  %s4 = inlined_call_operand.vmem [shape: f32[8,32], index: 4, kind: input, shape index: {}]
  %s5 = inlined_call_operand.vmem [shape: f32[8,2], index: 5, kind: input, shape index: {}]
  %s6 = inlined_call_operand.vmem [shape: bf16[8,32], index: 6, kind: input, shape index: {}]
  %s7 = inlined_call_operand.vmem [shape: bf16[8,33], index: 7, kind: input, shape index: {}]
  %s8 = inlined_call_operand.vmem [shape: bf16[8,3], index: 8, kind: input, shape index: {}]
  %s9 = inlined_call_operand.vmem [shape: f32[1,32,8], index: 9, kind: input, shape index: {}]
  %s10 = inlined_call_operand.hbm [shape: f32[8,32], index: 10, kind: output, shape index: {0}]
  %s11 = inlined_call_operand.vmem [shape: f32[8,2], index: 11, kind: output, shape index: {1}]
  %12 = xla_tuple %s10, %s11
  %s13 = sld [smem:[#allocation0]]
  $region70: #{tpu_custom_call.1} parent=0
    _
  %s15 = ssub.s32 1, %s13
  %s16 = scalar_select 0, %s15, %s13
  %17 = sst [smem:[#allocation5]] %s1
  $region1: #{tpu_custom_call.1} parent=0
    #allocation6 [shape = 'u8[512]{0}', space=smem, size = 0x200, scoped, tag = 'input window, operand 0, single buffered']
    #allocation7 [shape = 's32[1]{0}', space=sflag, size = 0x4, scoped, tag = 'scoped memory for tpu_custom_call.1']
    #allocation8 [shape = 's32[1]{0}', space=sflag, size = 0x4, scoped, tag = 'scoped memory for tpu_custom_call.1']
    #allocation9 [shape = 'u8[4096]{0}', space=vmem, size = 0x1000, scoped, tag = 'output window, operand 0, single buffered']
    %18 = vsyncpa [#allocation8], 0
    %19 = vsyncpa [#allocation7], 0
    // Predicated region
    $region2: #{tpu_custom_call.1} parent=1 // pred_check
      _
    $region3: #{tpu_custom_call.1} parent=1 // pred_check_branch
      %21 = sbr.rel (0) target = $region5
    $region4: #{tpu_custom_call.1} parent=1 // pred_region
      %s23 = ssub.s32 16, 16
      %24 = vsyncadd [#allocation8], %s23
      %s26 = sshll.u32 %s0, 4
      %s27 = int_to_ptr.vmem [resolvable:$true] %s26
      %29 = dma.vmem_to_smem %s27, 16, [#allocation6], [#allocation8]
    $region5: #{tpu_custom_call.1} parent=1 // pred_fallthru
      _
    // Predicated region
    $region6: #{tpu_custom_call.1} parent=1 // pred_check
      _
    $region7: #{tpu_custom_call.1} parent=1 // pred_check_branch
      %31 = sbr.rel (0) target = $region9
    $region8: #{tpu_custom_call.1} parent=1 // pred_region
      _
    $region9: #{tpu_custom_call.1} parent=1 // pred_fallthru
      _
    // Predicated region
    $region10: #{tpu_custom_call.1} parent=1 // pred_check
      _
    $region11: #{tpu_custom_call.1} parent=1 // pred_check_branch
      %33 = sbr.rel (0) target = $region13
    $region12: #{tpu_custom_call.1} parent=1 // pred_region
      _
    $region13: #{tpu_custom_call.1} parent=1 // pred_fallthru
      _
    // Predicated region
    $region14: #{tpu_custom_call.1} parent=1 // pred_check
      _
    $region15: #{tpu_custom_call.1} parent=1 // pred_check_branch
      %35 = sbr.rel (0) target = $region17
    $region16: #{tpu_custom_call.1} parent=1 // pred_region
      _
    $region17: #{tpu_custom_call.1} parent=1 // pred_fallthru
      _
    // Predicated region
    $region18: #{tpu_custom_call.1} parent=1 // pred_check
      _
    $region19: #{tpu_custom_call.1} parent=1 // pred_check_branch
      %37 = sbr.rel (0) target = $region21
    $region20: #{tpu_custom_call.1} parent=1 // pred_region
      _
    $region21: #{tpu_custom_call.1} parent=1 // pred_fallthru
      _
    // Predicated region
    $region22: #{tpu_custom_call.1} parent=1 // pred_check
      _
    $region23: #{tpu_custom_call.1} parent=1 // pred_check_branch
      %39 = sbr.rel (0) target = $region25
    $region24: #{tpu_custom_call.1} parent=1 // pred_region
      _
    $region25: #{tpu_custom_call.1} parent=1 // pred_fallthru
      _
    // Predicated region
    $region26: #{tpu_custom_call.1} parent=1 // pred_check
      _
    $region27: #{tpu_custom_call.1} parent=1 // pred_check_branch
      %41 = sbr.rel (0) target = $region29
    $region28: #{tpu_custom_call.1} parent=1 // pred_region
      _
    $region29: #{tpu_custom_call.1} parent=1 // pred_fallthru
      _
    // Predicated region
    $region30: #{tpu_custom_call.1} parent=1 // pred_check
      _
    $region31: #{tpu_custom_call.1} parent=1 // pred_check_branch
      %43 = sbr.rel (0) target = $region33
    $region32: #{tpu_custom_call.1} parent=1 // pred_region
      _
    $region33: #{tpu_custom_call.1} parent=1 // pred_fallthru
      _
    // Predicated region
    $region34: #{tpu_custom_call.1} parent=1 // pred_check
      _
    $region35: #{tpu_custom_call.1} parent=1 // pred_check_branch
      %45 = sbr.rel (0) target = $region37
    $region36: #{tpu_custom_call.1} parent=1 // pred_region
      _
    $region37: #{tpu_custom_call.1} parent=1 // pred_fallthru
      _
    // Predicated region
    $region38: #{tpu_custom_call.1} parent=1 // pred_check
      _
    $region39: #{tpu_custom_call.1} parent=1 // pred_check_branch
      %47 = sbr.rel (0) target = $region41
    $region40: #{tpu_custom_call.1} parent=1 // pred_region
      _
    $region41: #{tpu_custom_call.1} parent=1 // pred_fallthru
      _
    // Predicated region
    $region42: #{tpu_custom_call.1} parent=1 // pred_check
      _
    $region43: #{tpu_custom_call.1} parent=1 // pred_check_branch
      %49 = sbr.rel (0) target = $region45
    $region44: #{tpu_custom_call.1} parent=1 // pred_region
      %50 = dma.done [#allocation8], 16
    $region45: #{tpu_custom_call.1} parent=1 // pred_fallthru
      _
    %51 = sfence
    %p53 = scmp.eq.s32.totalorder 0, 0
    // Predicated region
    $region46: #{tpu_custom_call.1} parent=1 // pred_check
      %p54 = pneg %p53
    $region47: #{tpu_custom_call.1} parent=1 // pred_check_branch
      %56 = sbr.rel (%p54) target = $region49
    $region48: #{tpu_custom_call.1} parent=1 // pred_region
      %vm57 = vcmask 7168
      %58 = vst.msk [vmem:[#allocation2] sm:$0xff] %vm57, -inf
      %vm59 = vcmask 269312
      %60 = vst.msk [vmem:[#allocation3] sm:$0xff] %vm59, 0.0
      %vm61 = vcmask 23552
      %62 = vst.msk [vmem:[#allocation4] sm:$0xff] %vm61, 0.0
    $region49: #{tpu_custom_call.1} parent=1 // pred_fallthru
      _
    %v63 = vld [vmem:[%s2] sm:$0xf]
    %v64 = vld [vmem:[%s6] sm:$0xf]
    %vm65 = vcmask 261120
    %v67 = vsel %vm65, %v63, 0
    %v70 = vsel %vm65, %v64, 0
    %72 = vmatprep.subr.bf16.mxu0 0
    %73 = vmatpush1.bf16.xpose.msra.mxu0 %v70
    %74 = vmatprep.subr.bf16.mxu0 0
    %75 = vmatpush1.bf16.xpose.msra.mxu0 0
    %76 = vmatprep.subr.bf16.mxu0 0
    %77 = vmatpush1.bf16.xpose.msra.mxu0 0
    %78 = vmatprep.subr.bf16.mxu0 0
    %79 = vmatpush1.bf16.xpose.msra.mxu0 0
    %80 = vmatprep.subr.bf16.mxu0 0
    %81 = vmatpush1.bf16.xpose.msra.mxu0 0
    %82 = vmatprep.subr.bf16.mxu0 0
    %83 = vmatpush1.bf16.xpose.msra.mxu0 0
    %84 = vmatprep.subr.bf16.mxu0 0
    %85 = vmatpush1.bf16.xpose.msra.mxu0 0
    %86 = vmatprep.subr.bf16.mxu0 0
    %87 = vmatpush1.bf16.xpose.msra.mxu0 0
    %88 = vmatprep.subr.bf16.mxu0 0
    %89 = vmatpush1.bf16.xpose.msra.mxu0 0
    %90 = vmatprep.subr.bf16.mxu0 0
    %91 = vmatpush1.bf16.xpose.msra.mxu0 0
    %92 = vmatprep.subr.bf16.mxu0 0
    %93 = vmatpush1.bf16.xpose.msra.mxu0 0
    %94 = vmatprep.subr.bf16.mxu0 0
    %95 = vmatpush1.bf16.xpose.msra.mxu0 0
    %96 = vmatprep.subr.bf16.mxu0 0
    %97 = vmatpush1.bf16.xpose.msra.mxu0 0
    %98 = vmatprep.subr.bf16.mxu0 0
    %99 = vmatpush1.bf16.xpose.msra.mxu0 0
    %100 = vmatprep.subr.bf16.mxu0 0
    %101 = vmatpush1.bf16.xpose.msra.mxu0 0
    %102 = vmatprep.subr.bf16.mxu0 0
    %103 = vmatpush1.bf16.xpose.msra.mxu0 0
    %104 = vmatprep.mubr.bf16.mxu0 0
    %105 = vmatmul.mubr.bf16.gmra.mrb[0].mxu0 %v67
    %v106 = vpop.f32.mrb[0].mxu0
    %v107 = vadd.f32 0.0, %v106
    %v108 = vpop.f32.mrb[0].mxu0
    %v109 = vpop.f32.mrb[0].mxu0
    %v110 = vpop.f32.mrb[0].mxu0
    %111 = vdwg.mxu0
    %v112 = vmul.f32 %v107, 0.17677669
    %v113 = vld [vmem:[#allocation2] sm:$0xff]
    %vm114 = vcmask 64512
    %v115 = vsel %vm114, %v112, -inf
    %116 = vmax.xlane.f32.xlu0 %v115
    %v117 = vpop.xlane.xlu0 %116
    %v118 = vmax.f32 %v113, %v117
    %v119 = vsub.f32 %v113, %v118
    %v120 = vmul.f32 %v119, 1.442695
    %v121 = vpow.pop %v120
    %123 = vset.pattern.permute.xlu0 0
    %124 = vperm.xlu0 %123, %v118
    %v125 = vpop.permute.xlu0 %124
    %v127 = vsub.f32 %v112, %v125
    %v128 = vmul.f32 %v127, 1.442695
    %v129 = vpow.pop %v128
    %vm130 = vcmask 7168
    %131 = vst.msk [vmem:[#allocation2] sm:$0xff] %vm130, %v118
    %v132 = vld [vmem:[#allocation3] sm:$0xff]
    %134 = vset.pattern.permute.xlu0 0
    %135 = vperm.xlu0 %134, %v121
    %v136 = vpop.permute.xlu0 %135
    %v138 = vmul.f32 %v136, %v132
    %v139 = vpack.c.bf16 %v129, %v129
    %v140 = vld [vmem:[%s7] sm:$0xf]
    %v142 = vsel %vm114, %v139, 0
    %vm144 = vcmask 1043456
    %v146 = vsel %vm144, %v140, 0
    %148 = vmatprep.subr.bf16.mxu0 0
    %149 = vmatpush1.bf16.msra.mxu0 %v146
    %150 = vmatprep.subr.bf16.mxu0 0
    %151 = vmatpush1.bf16.msra.mxu0 0
    %152 = vmatprep.subr.bf16.mxu0 0
    %153 = vmatpush1.bf16.msra.mxu0 0
    %154 = vmatprep.subr.bf16.mxu0 0
    %155 = vmatpush1.bf16.msra.mxu0 0
    %156 = vmatprep.subr.bf16.mxu0 0
    %157 = vmatpush1.bf16.msra.mxu0 0
    %158 = vmatprep.subr.bf16.mxu0 0
    %159 = vmatpush1.bf16.msra.mxu0 0
    %160 = vmatprep.subr.bf16.mxu0 0
    %161 = vmatpush1.bf16.msra.mxu0 0
    %162 = vmatprep.subr.bf16.mxu0 0
    %163 = vmatpush1.bf16.msra.mxu0 0
    %164 = vmatprep.subr.bf16.mxu0 0
    %165 = vmatpush1.bf16.msra.mxu0 0
    %166 = vmatprep.subr.bf16.mxu0 0
    %167 = vmatpush1.bf16.msra.mxu0 0
    %168 = vmatprep.subr.bf16.mxu0 0
    %169 = vmatpush1.bf16.msra.mxu0 0
    %170 = vmatprep.subr.bf16.mxu0 0
    %171 = vmatpush1.bf16.msra.mxu0 0
    %172 = vmatprep.subr.bf16.mxu0 0
    %173 = vmatpush1.bf16.msra.mxu0 0
    %174 = vmatprep.subr.bf16.mxu0 0
    %175 = vmatpush1.bf16.msra.mxu0 0
    %176 = vmatprep.subr.bf16.mxu0 0
    %177 = vmatpush1.bf16.msra.mxu0 0
    %178 = vmatprep.subr.bf16.mxu0 0
    %179 = vmatpush1.bf16.msra.mxu0 0
    %180 = vmatprep.mubr.bf16.mxu0 0
    %181 = vmatmul.mubr.bf16.gmra.mrb[0].mxu0 %v142
    %v182 = vpop.f32.mrb[0].mxu0
    %v183 = vadd.f32 0.0, %v182
    %v184 = vpop.f32.mrb[0].mxu0
    %v185 = vpop.f32.mrb[0].mxu0
    %v186 = vpop.f32.mrb[0].mxu0
    %187 = vdwg.mxu0
    %v188 = vadd.f32 %v138, %v183
    %vm189 = vcmask 269312
    %190 = vst.msk [vmem:[#allocation3] sm:$0xff] %vm189, %v188
    %v191 = vld [vmem:[%s3] sm:$0xff]
    %v192 = vld [vmem:[%s9] sm:$0xff]
    %v193 = vld [vmem:[%s9 + $0x8] sm:$0xff]
    %v194 = vld [vmem:[%s9 + $0x10] sm:$0xff]
    %v195 = vld [vmem:[%s9 + $0x18] sm:$0xff]
    %s196 = sld [smem:[#allocation5]]
    %v197 = vstv %s196
    %v198 = vadd.f32 %v197, 0.0
    %200 = vset.pattern.permute.xlu0 0
    %201 = vperm.xlu0 %200, %v191
    %v202 = vpop.permute.xlu0 %201
    %v204 = vlaneseq
    %v205 = vshrl.u32 %v204, 7
    %v206 = vsub.s32 0, %v205
    %v207 = vrot.slane %v192, %v206
    %v208 = vsub.f32 %v202, %v207
    %s209 = sld [smem:[#allocation6]]
    %v210 = vmax.f32 %v208, 0.0
    %v211 = vstv %s209
    %v212 = vmul.f32 %v211, %v210
    %v213 = vadd.f32 %v198, %v212
    %214 = vset.pattern.permute.xlu0 1
    %215 = vperm.xlu0 %214, %v191
    %v216 = vpop.permute.xlu0 %215
    %v218 = vlaneseq
    %v219 = vshrl.u32 %v218, 7
    %v220 = vsub.s32 1, %v219
    %v221 = vrot.slane %v192, %v220
    %v222 = vsub.f32 %v216, %v221
    %s223 = sld [smem:[#allocation6 + $0x1]]
    %v224 = vmax.f32 %v222, 0.0
    %v225 = vstv %s223
    %v226 = vmul.f32 %v225, %v224
    %v227 = vadd.f32 %v213, %v226
    %228 = vset.pattern.permute.xlu0 2
    %229 = vperm.xlu0 %228, %v191
    %v230 = vpop.permute.xlu0 %229
    %v232 = vlaneseq
    %v233 = vshrl.u32 %v232, 7
    %v234 = vsub.s32 2, %v233
    %v235 = vrot.slane %v192, %v234
    %v236 = vsub.f32 %v230, %v235
    %s237 = sld [smem:[#allocation6 + $0x2]]
    %v238 = vmax.f32 %v236, 0.0
    %v239 = vstv %s237
    %v240 = vmul.f32 %v239, %v238
    %v241 = vadd.f32 %v227, %v240
    %242 = vset.pattern.permute.xlu0 3
    %243 = vperm.xlu0 %242, %v191
    %v244 = vpop.permute.xlu0 %243
    %v246 = vlaneseq
    %v247 = vshrl.u32 %v246, 7
    %v248 = vsub.s32 3, %v247
    %v249 = vrot.slane %v192, %v248
    %v250 = vsub.f32 %v244, %v249
    %s251 = sld [smem:[#allocation6 + $0x3]]
    %v252 = vmax.f32 %v250, 0.0
    %v253 = vstv %s251
    %v254 = vmul.f32 %v253, %v252
    %v255 = vadd.f32 %v241, %v254
    %256 = vset.pattern.permute.xlu0 4
    %257 = vperm.xlu0 %256, %v191
    %v258 = vpop.permute.xlu0 %257
    %v260 = vlaneseq
    %v261 = vshrl.u32 %v260, 7
    %v262 = vsub.s32 4, %v261
    %v263 = vrot.slane %v192, %v262
    %v264 = vsub.f32 %v258, %v263
    %s265 = sld [smem:[#allocation6 + $0x4]]
    %v266 = vmax.f32 %v264, 0.0
    %v267 = vstv %s265
    %v268 = vmul.f32 %v267, %v266
    %v269 = vadd.f32 %v255, %v268
    %270 = vset.pattern.permute.xlu0 5
    %271 = vperm.xlu0 %270, %v191
    %v272 = vpop.permute.xlu0 %271
    %v274 = vlaneseq
    %v275 = vshrl.u32 %v274, 7
    %v276 = vsub.s32 5, %v275
    %v277 = vrot.slane %v192, %v276
    %v278 = vsub.f32 %v272, %v277
    %s279 = sld [smem:[#allocation6 + $0x5]]
    %v280 = vmax.f32 %v278, 0.0
    %v281 = vstv %s279
    %v282 = vmul.f32 %v281, %v280
    %v283 = vadd.f32 %v269, %v282
    %284 = vset.pattern.permute.xlu0 6
    %285 = vperm.xlu0 %284, %v191
    %v286 = vpop.permute.xlu0 %285
    %v288 = vlaneseq
    %v289 = vshrl.u32 %v288, 7
    %v290 = vsub.s32 6, %v289
    %v291 = vrot.slane %v192, %v290
    %v292 = vsub.f32 %v286, %v291
    %s293 = sld [smem:[#allocation6 + $0x6]]
    %v294 = vmax.f32 %v292, 0.0
    %v295 = vstv %s293
    %v296 = vmul.f32 %v295, %v294
    %v297 = vadd.f32 %v283, %v296
    %298 = vset.pattern.permute.xlu0 7
    %299 = vperm.xlu0 %298, %v191
    %v300 = vpop.permute.xlu0 %299
    %v302 = vlaneseq
    %v303 = vshrl.u32 %v302, 7
    %v304 = vsub.s32 7, %v303
    %v305 = vrot.slane %v192, %v304
    %v306 = vsub.f32 %v300, %v305
    %s307 = sld [smem:[#allocation6 + $0x7]]
    %v308 = vmax.f32 %v306, 0.0
    %v309 = vstv %s307
    %v310 = vmul.f32 %v309, %v308
    %v311 = vadd.f32 %v297, %v310
    %312 = vset.pattern.permute.xlu0 8
    %313 = vperm.xlu0 %312, %v191
    %v314 = vpop.permute.xlu0 %313
    %v316 = vlaneseq
    %v317 = vshrl.u32 %v316, 7
    %v318 = vsub.s32 0, %v317
    %v319 = vrot.slane %v193, %v318
    %v320 = vsub.f32 %v314, %v319
    %s321 = sld [smem:[#allocation6 + $0x8]]
    %v322 = vmax.f32 %v320, 0.0
    %v323 = vstv %s321
    %v324 = vmul.f32 %v323, %v322
    %v325 = vadd.f32 %v311, %v324
    %326 = vset.pattern.permute.xlu0 9
    %327 = vperm.xlu0 %326, %v191
    %v328 = vpop.permute.xlu0 %327
    %v330 = vlaneseq
    %v331 = vshrl.u32 %v330, 7
    %v332 = vsub.s32 1, %v331
    %v333 = vrot.slane %v193, %v332
    %v334 = vsub.f32 %v328, %v333
    %s335 = sld [smem:[#allocation6 + $0x9]]
    %v336 = vmax.f32 %v334, 0.0
    %v337 = vstv %s335
    %v338 = vmul.f32 %v337, %v336
    %v339 = vadd.f32 %v325, %v338
    %340 = vset.pattern.permute.xlu0 10
    %341 = vperm.xlu0 %340, %v191
    %v342 = vpop.permute.xlu0 %341
    %v344 = vlaneseq
    %v345 = vshrl.u32 %v344, 7
    %v346 = vsub.s32 2, %v345
    %v347 = vrot.slane %v193, %v346
    %v348 = vsub.f32 %v342, %v347
    %s349 = sld [smem:[#allocation6 + $0xa]]
    %v350 = vmax.f32 %v348, 0.0
    %v351 = vstv %s349
    %v352 = vmul.f32 %v351, %v350
    %v353 = vadd.f32 %v339, %v352
    %354 = vset.pattern.permute.xlu0 11
    %355 = vperm.xlu0 %354, %v191
    %v356 = vpop.permute.xlu0 %355
    %v358 = vlaneseq
    %v359 = vshrl.u32 %v358, 7
    %v360 = vsub.s32 3, %v359
    %v361 = vrot.slane %v193, %v360
    %v362 = vsub.f32 %v356, %v361
    %s363 = sld [smem:[#allocation6 + $0xb]]
    %v364 = vmax.f32 %v362, 0.0
    %v365 = vstv %s363
    %v366 = vmul.f32 %v365, %v364
    %v367 = vadd.f32 %v353, %v366
    %368 = vset.pattern.permute.xlu0 12
    %369 = vperm.xlu0 %368, %v191
    %v370 = vpop.permute.xlu0 %369
    %v372 = vlaneseq
    %v373 = vshrl.u32 %v372, 7
    %v374 = vsub.s32 4, %v373
    %v375 = vrot.slane %v193, %v374
    %v376 = vsub.f32 %v370, %v375
    %s377 = sld [smem:[#allocation6 + $0xc]]
    %v378 = vmax.f32 %v376, 0.0
    %v379 = vstv %s377
    %v380 = vmul.f32 %v379, %v378
    %v381 = vadd.f32 %v367, %v380
    %382 = vset.pattern.permute.xlu0 13
    %383 = vperm.xlu0 %382, %v191
    %v384 = vpop.permute.xlu0 %383
    %v386 = vlaneseq
    %v387 = vshrl.u32 %v386, 7
    %v388 = vsub.s32 5, %v387
    %v389 = vrot.slane %v193, %v388
    %v390 = vsub.f32 %v384, %v389
    %s391 = sld [smem:[#allocation6 + $0xd]]
    %v392 = vmax.f32 %v390, 0.0
    %v393 = vstv %s391
    %v394 = vmul.f32 %v393, %v392
    %v395 = vadd.f32 %v381, %v394
    %396 = vset.pattern.permute.xlu0 14
    %397 = vperm.xlu0 %396, %v191
    %v398 = vpop.permute.xlu0 %397
    %v400 = vlaneseq
    %v401 = vshrl.u32 %v400, 7
    %v402 = vsub.s32 6, %v401
    %v403 = vrot.slane %v193, %v402
    %v404 = vsub.f32 %v398, %v403
    %s405 = sld [smem:[#allocation6 + $0xe]]
    %v406 = vmax.f32 %v404, 0.0
    %v407 = vstv %s405
    %v408 = vmul.f32 %v407, %v406
    %v409 = vadd.f32 %v395, %v408
    %410 = vset.pattern.permute.xlu0 15
    %411 = vperm.xlu0 %410, %v191
    %v412 = vpop.permute.xlu0 %411
    %v414 = vlaneseq
    %v415 = vshrl.u32 %v414, 7
    %v416 = vsub.s32 7, %v415
    %v417 = vrot.slane %v193, %v416
    %v418 = vsub.f32 %v412, %v417
    %s419 = sld [smem:[#allocation6 + $0xf]]
    %v420 = vmax.f32 %v418, 0.0
    %v421 = vstv %s419
    %v422 = vmul.f32 %v421, %v420
    %v423 = vadd.f32 %v409, %v422
    %424 = vset.pattern.permute.xlu0 16
    %425 = vperm.xlu0 %424, %v191
    %v426 = vpop.permute.xlu0 %425
    %v428 = vlaneseq
    %v429 = vshrl.u32 %v428, 7
    %v430 = vsub.s32 0, %v429
    %v431 = vrot.slane %v194, %v430
    %v432 = vsub.f32 %v426, %v431
    %s433 = sld [smem:[#allocation6 + $0x10]]
    %v434 = vmax.f32 %v432, 0.0
    %v435 = vstv %s433
    %v436 = vmul.f32 %v435, %v434
    %v437 = vadd.f32 %v423, %v436
    %438 = vset.pattern.permute.xlu0 17
    %439 = vperm.xlu0 %438, %v191
    %v440 = vpop.permute.xlu0 %439
    %v442 = vlaneseq
    %v443 = vshrl.u32 %v442, 7
    %v444 = vsub.s32 1, %v443
    %v445 = vrot.slane %v194, %v444
    %v446 = vsub.f32 %v440, %v445
    %s447 = sld [smem:[#allocation6 + $0x11]]
    %v448 = vmax.f32 %v446, 0.0
    %v449 = vstv %s447
    %v450 = vmul.f32 %v449, %v448
    %v451 = vadd.f32 %v437, %v450
    %452 = vset.pattern.permute.xlu0 18
    %453 = vperm.xlu0 %452, %v191
    %v454 = vpop.permute.xlu0 %453
    %v456 = vlaneseq
    %v457 = vshrl.u32 %v456, 7
    %v458 = vsub.s32 2, %v457
    %v459 = vrot.slane %v194, %v458
    %v460 = vsub.f32 %v454, %v459
    %s461 = sld [smem:[#allocation6 + $0x12]]
    %v462 = vmax.f32 %v460, 0.0
    %v463 = vstv %s461
    %v464 = vmul.f32 %v463, %v462
    %v465 = vadd.f32 %v451, %v464
    %466 = vset.pattern.permute.xlu0 19
    %467 = vperm.xlu0 %466, %v191
    %v468 = vpop.permute.xlu0 %467
    %v470 = vlaneseq
    %v471 = vshrl.u32 %v470, 7
    %v472 = vsub.s32 3, %v471
    %v473 = vrot.slane %v194, %v472
    %v474 = vsub.f32 %v468, %v473
    %s475 = sld [smem:[#allocation6 + $0x13]]
    %v476 = vmax.f32 %v474, 0.0
    %v477 = vstv %s475
    %v478 = vmul.f32 %v477, %v476
    %v479 = vadd.f32 %v465, %v478
    %480 = vset.pattern.permute.xlu0 20
    %481 = vperm.xlu0 %480, %v191
    %v482 = vpop.permute.xlu0 %481
    %v484 = vlaneseq
    %v485 = vshrl.u32 %v484, 7
    %v486 = vsub.s32 4, %v485
    %v487 = vrot.slane %v194, %v486
    %v488 = vsub.f32 %v482, %v487
    %s489 = sld [smem:[#allocation6 + $0x14]]
    %v490 = vmax.f32 %v488, 0.0
    %v491 = vstv %s489
    %v492 = vmul.f32 %v491, %v490
    %v493 = vadd.f32 %v479, %v492
    %494 = vset.pattern.permute.xlu0 21
    %495 = vperm.xlu0 %494, %v191
    %v496 = vpop.permute.xlu0 %495
    %v498 = vlaneseq
    %v499 = vshrl.u32 %v498, 7
    %v500 = vsub.s32 5, %v499
    %v501 = vrot.slane %v194, %v500
    %v502 = vsub.f32 %v496, %v501
    %s503 = sld [smem:[#allocation6 + $0x15]]
    %v504 = vmax.f32 %v502, 0.0
    %v505 = vstv %s503
    %v506 = vmul.f32 %v505, %v504
    %v507 = vadd.f32 %v493, %v506
    %508 = vset.pattern.permute.xlu0 22
    %509 = vperm.xlu0 %508, %v191
    %v510 = vpop.permute.xlu0 %509
    %v512 = vlaneseq
    %v513 = vshrl.u32 %v512, 7
    %v514 = vsub.s32 6, %v513
    %v515 = vrot.slane %v194, %v514
    %v516 = vsub.f32 %v510, %v515
    %s517 = sld [smem:[#allocation6 + $0x16]]
    %v518 = vmax.f32 %v516, 0.0
    %v519 = vstv %s517
    %v520 = vmul.f32 %v519, %v518
    %v521 = vadd.f32 %v507, %v520
    %522 = vset.pattern.permute.xlu0 23
    %523 = vperm.xlu0 %522, %v191
    %v524 = vpop.permute.xlu0 %523
    %v526 = vlaneseq
    %v527 = vshrl.u32 %v526, 7
    %v528 = vsub.s32 7, %v527
    %v529 = vrot.slane %v194, %v528
    %v530 = vsub.f32 %v524, %v529
    %s531 = sld [smem:[#allocation6 + $0x17]]
    %v532 = vmax.f32 %v530, 0.0
    %v533 = vstv %s531
    %v534 = vmul.f32 %v533, %v532
    %v535 = vadd.f32 %v521, %v534
    %536 = vset.pattern.permute.xlu0 24
    %537 = vperm.xlu0 %536, %v191
    %v538 = vpop.permute.xlu0 %537
    %v540 = vlaneseq
    %v541 = vshrl.u32 %v540, 7
    %v542 = vsub.s32 0, %v541
    %v543 = vrot.slane %v195, %v542
    %v544 = vsub.f32 %v538, %v543
    %s545 = sld [smem:[#allocation6 + $0x18]]
    %v546 = vmax.f32 %v544, 0.0
    %v547 = vstv %s545
    %v548 = vmul.f32 %v547, %v546
    %v549 = vadd.f32 %v535, %v548
    %550 = vset.pattern.permute.xlu0 25
    %551 = vperm.xlu0 %550, %v191
    %v552 = vpop.permute.xlu0 %551
    %v554 = vlaneseq
    %v555 = vshrl.u32 %v554, 7
    %v556 = vsub.s32 1, %v555
    %v557 = vrot.slane %v195, %v556
    %v558 = vsub.f32 %v552, %v557
    %s559 = sld [smem:[#allocation6 + $0x19]]
    %v560 = vmax.f32 %v558, 0.0
    %v561 = vstv %s559
    %v562 = vmul.f32 %v561, %v560
    %v563 = vadd.f32 %v549, %v562
    %564 = vset.pattern.permute.xlu0 26
    %565 = vperm.xlu0 %564, %v191
    %v566 = vpop.permute.xlu0 %565
    %v568 = vlaneseq
    %v569 = vshrl.u32 %v568, 7
    %v570 = vsub.s32 2, %v569
    %v571 = vrot.slane %v195, %v570
    %v572 = vsub.f32 %v566, %v571
    %s573 = sld [smem:[#allocation6 + $0x1a]]
    %v574 = vmax.f32 %v572, 0.0
    %v575 = vstv %s573
    %v576 = vmul.f32 %v575, %v574
    %v577 = vadd.f32 %v563, %v576
    %578 = vset.pattern.permute.xlu0 27
    %579 = vperm.xlu0 %578, %v191
    %v580 = vpop.permute.xlu0 %579
    %v582 = vlaneseq
    %v583 = vshrl.u32 %v582, 7
    %v584 = vsub.s32 3, %v583
    %v585 = vrot.slane %v195, %v584
    %v586 = vsub.f32 %v580, %v585
    %s587 = sld [smem:[#allocation6 + $0x1b]]
    %v588 = vmax.f32 %v586, 0.0
    %v589 = vstv %s587
    %v590 = vmul.f32 %v589, %v588
    %v591 = vadd.f32 %v577, %v590
    %592 = vset.pattern.permute.xlu0 28
    %593 = vperm.xlu0 %592, %v191
    %v594 = vpop.permute.xlu0 %593
    %v596 = vlaneseq
    %v597 = vshrl.u32 %v596, 7
    %v598 = vsub.s32 4, %v597
    %v599 = vrot.slane %v195, %v598
    %v600 = vsub.f32 %v594, %v599
    %s601 = sld [smem:[#allocation6 + $0x1c]]
    %v602 = vmax.f32 %v600, 0.0
    %v603 = vstv %s601
    %v604 = vmul.f32 %v603, %v602
    %v605 = vadd.f32 %v591, %v604
    %606 = vset.pattern.permute.xlu0 29
    %607 = vperm.xlu0 %606, %v191
    %v608 = vpop.permute.xlu0 %607
    %v610 = vlaneseq
    %v611 = vshrl.u32 %v610, 7
    %v612 = vsub.s32 5, %v611
    %v613 = vrot.slane %v195, %v612
    %v614 = vsub.f32 %v608, %v613
    %s615 = sld [smem:[#allocation6 + $0x1d]]
    %v616 = vmax.f32 %v614, 0.0
    %v617 = vstv %s615
    %v618 = vmul.f32 %v617, %v616
    %v619 = vadd.f32 %v605, %v618
    %620 = vset.pattern.permute.xlu0 30
    %621 = vperm.xlu0 %620, %v191
    %v622 = vpop.permute.xlu0 %621
    %v624 = vlaneseq
    %v625 = vshrl.u32 %v624, 7
    %v626 = vsub.s32 6, %v625
    %v627 = vrot.slane %v195, %v626
    %v628 = vsub.f32 %v622, %v627
    %s629 = sld [smem:[#allocation6 + $0x1e]]
    %v630 = vmax.f32 %v628, 0.0
    %v631 = vstv %s629
    %v632 = vmul.f32 %v631, %v630
    %v633 = vadd.f32 %v619, %v632
    %634 = vset.pattern.permute.xlu0 31
    %635 = vperm.xlu0 %634, %v191
    %v636 = vpop.permute.xlu0 %635
    %v638 = vlaneseq
    %v639 = vshrl.u32 %v638, 7
    %v640 = vsub.s32 7, %v639
    %v641 = vrot.slane %v195, %v640
    %v642 = vsub.f32 %v636, %v641
    %s643 = sld [smem:[#allocation6 + $0x1f]]
    %v644 = vmax.f32 %v642, 0.0
    %v645 = vstv %s643
    %v646 = vmul.f32 %v645, %v644
    %v647 = vadd.f32 %v633, %v646
    %v648 = vmul.f32 %v129, %v647
    %v649 = vpack.c.bf16 %v648, %v648
    %v650 = vld [vmem:[#allocation4] sm:$0xff]
    %v651 = vmul.f32 %v136, %v650
    %v652 = vld [vmem:[%s8] sm:$0xf]
    %v654 = vsel %vm114, %v649, 0
    %v657 = vsel %vm144, %v652, 0
    %659 = vmatprep.subr.bf16.mxu0 0
    %660 = vmatpush1.bf16.msra.mxu0 %v657
    %661 = vmatprep.subr.bf16.mxu0 0
    %662 = vmatpush1.bf16.msra.mxu0 0
    %663 = vmatprep.subr.bf16.mxu0 0
    %664 = vmatpush1.bf16.msra.mxu0 0
    %665 = vmatprep.subr.bf16.mxu0 0
    %666 = vmatpush1.bf16.msra.mxu0 0
    %667 = vmatprep.subr.bf16.mxu0 0
    %668 = vmatpush1.bf16.msra.mxu0 0
    %669 = vmatprep.subr.bf16.mxu0 0
    %670 = vmatpush1.bf16.msra.mxu0 0
    %671 = vmatprep.subr.bf16.mxu0 0
    %672 = vmatpush1.bf16.msra.mxu0 0
    %673 = vmatprep.subr.bf16.mxu0 0
    %674 = vmatpush1.bf16.msra.mxu0 0
    %675 = vmatprep.subr.bf16.mxu0 0
    %676 = vmatpush1.bf16.msra.mxu0 0
    %677 = vmatprep.subr.bf16.mxu0 0
    %678 = vmatpush1.bf16.msra.mxu0 0
    %679 = vmatprep.subr.bf16.mxu0 0
    %680 = vmatpush1.bf16.msra.mxu0 0
    %681 = vmatprep.subr.bf16.mxu0 0
    %682 = vmatpush1.bf16.msra.mxu0 0
    %683 = vmatprep.subr.bf16.mxu0 0
    %684 = vmatpush1.bf16.msra.mxu0 0
    %685 = vmatprep.subr.bf16.mxu0 0
    %686 = vmatpush1.bf16.msra.mxu0 0
    %687 = vmatprep.subr.bf16.mxu0 0
    %688 = vmatpush1.bf16.msra.mxu0 0
    %689 = vmatprep.subr.bf16.mxu0 0
    %690 = vmatpush1.bf16.msra.mxu0 0
    %691 = vmatprep.mubr.bf16.mxu0 0
    %692 = vmatmul.mubr.bf16.gmra.mrb[0].mxu0 %v654
    %v693 = vpop.f32.mrb[0].mxu0
    %v694 = vadd.f32 0.0, %v693
    %v695 = vpop.f32.mrb[0].mxu0
    %v696 = vpop.f32.mrb[0].mxu0
    %v697 = vpop.f32.mrb[0].mxu0
    %698 = vdwg.mxu0
    %v699 = vadd.f32 %v651, %v694
    %vm700 = vcmask 23552
    %701 = vst.msk [vmem:[#allocation4] sm:$0xff] %vm700, %v699
    // Predicated region
    $region50: #{tpu_custom_call.1} parent=1 // pred_check
      %p702 = pneg %p53
    $region51: #{tpu_custom_call.1} parent=1 // pred_check_branch
      %704 = sbr.rel (%p702) target = $region53
    $region52: #{tpu_custom_call.1} parent=1 // pred_region
      %v705 = vld [vmem:[#allocation3] sm:$0xff]
      %v706 = vrcp.pop %v705
      %v707 = vmul.f32 1.0, %v706
      %v708 = vld [vmem:[%s4] sm:$0xff]
      %710 = vset.pattern.permute.xlu0 32
      %711 = vperm.xlu0 %710, %v707
      %v712 = vpop.permute.xlu0 %711
      %v714 = vmul.f32 %v705, %v712
      %v715 = vadd.f32 %v708, %v714
      %716 = vst.msk [vmem:[#allocation9] sm:$0xff] %vm65, %v715
      %v717 = vld [vmem:[#allocation4] sm:$0xff]
      %v718 = vld [vmem:[%s5] sm:$0xff]
      %720 = vset.pattern.permute.xlu0 2
      %721 = vperm.xlu0 %720, %v717
      %v722 = vpop.permute.xlu0 %721
      %v724 = vmul.f32 %v718, %v722
      %v725 = vsub.f32 %v724, %v717
      %v726 = vmul.f32 %v725, %v712
      %v727 = vadd.f32 %v718, %v726
      %vm728 = vcmask 15360
      %729 = vst.msk [vmem:[%s11] sm:$0xff] %vm728, %v727
    $region53: #{tpu_custom_call.1} parent=1 // pred_fallthru
      _
    // Predicated region
    $region54: #{tpu_custom_call.1} parent=1 // pred_check
      _
    $region55: #{tpu_custom_call.1} parent=1 // pred_check_branch
      %731 = sbr.rel (0) target = $region57
    $region56: #{tpu_custom_call.1} parent=1 // pred_region
      %s733 = ssub.s32 128, 128
      %734 = vsyncadd [#allocation7], %s733
      %s736 = sshll.u32 [#allocation9], 4
      %s737 = int_to_ptr.vmem [resolvable:$true] %s736
      %739 = dma.vmem_to_hbm [thread:$0]  %s737, 128, %s10, [#allocation7]
    $region57: #{tpu_custom_call.1} parent=1 // pred_fallthru
      _
    // Predicated region
    $region58: #{tpu_custom_call.1} parent=1 // pred_check
      _
    $region59: #{tpu_custom_call.1} parent=1 // pred_check_branch
      %741 = sbr.rel (0) target = $region61
    $region60: #{tpu_custom_call.1} parent=1 // pred_region
      _
    $region61: #{tpu_custom_call.1} parent=1 // pred_fallthru
      _
    // Predicated region
    $region62: #{tpu_custom_call.1} parent=1 // pred_check
      _
    $region63: #{tpu_custom_call.1} parent=1 // pred_check_branch
      %743 = sbr.rel (0) target = $region65
    $region64: #{tpu_custom_call.1} parent=1 // pred_region
      %744 = dma.done [#allocation7], 128
    $region65: #{tpu_custom_call.1} parent=1 // pred_fallthru
      _
    // Predicated region
    $region66: #{tpu_custom_call.1} parent=1 // pred_check
      _
    $region67: #{tpu_custom_call.1} parent=1 // pred_check_branch
      %746 = sbr.rel (0) target = $region69
    $region68: #{tpu_custom_call.1} parent=1 // pred_region
      _
    $region69: #{tpu_custom_call.1} parent=1 // pred_fallthru
      _
    %747 = vsyncpa [#allocation7], 1
    %748 = vsyncpa [#allocation8], 1

</llo_original>
